<compile_context>
chip_gen: v6e
topology: v6e:2x2x1
jax: 0.10.0
libtpu: 0.0.40
codegen_flags: <defaults>
</compile_context>

<pallas_src>
import functools
import numpy as np
import jax
import jax.numpy as jnp
from jax import lax
from jax.experimental import pallas as pl
from jax.experimental.pallas import tpu as pltpu


# ------------------------------ Pallas kernel -------------------------------

def unet_inner_kernel(x_ref, w1_ref, w2_ref, wt_ref, bt_ref,
                      mask_ref, gpool_ref, scat_ref, o_ref, *, hp, wp):
    """Fused innermost UNet block for one sample (one grid step).

    x_ref    : (1, Cin, HW)     input sample, channels-first, spatial on lanes
    w1_ref   : (C1, 9*Cin)      conv1 weights, K stacked as (tap, cin)
    w2_ref   : (C1, 9*C1)       conv2 weights, K stacked as (tap, c1)
    wt_ref   : (4*Cin, C1)      ConvTranspose2d weights, M stacked as (tap, cout)
    bt_ref   : (Cin, 1)         ConvTranspose2d bias
    mask_ref : (9, HW4)  f32    per-tap zero-padding masks for the conv rolls
    gpool_ref: (HW, HW4) bf16   even-grid gather for the 2x2 max-pool
    scat_ref : (4*HW4, HW) bf16 fused stride-2 ConvTranspose scatter
    o_ref    : (1, 2*Cin, HW)   output [x ; upsampled], lane-dense
    """
    f32, bf16 = jnp.float32, jnp.bfloat16
    x = x_ref[0]                                   # (Cin, HW) f32
    cin, hw = x.shape
    hw4 = hp * wp
    w_full = 2 * wp
    masks = mask_ref[...]                          # (9, HW4) f32

    # --- MaxPool2d(2, 2): 2 rolls + maxes put each 2x2-window max at its
    #     top-left pixel, then one 0/1 gather picks the even-grid pixels.
    m1 = jnp.maximum(x, pltpu.roll(x, (hw - 1) % hw, 1))          # right neighbour
    m2 = jnp.maximum(m1, pltpu.roll(m1, (hw - w_full) % hw, 1))   # row below
    pooled = jnp.dot(m2.astype(bf16), gpool_ref[...],
                     preferred_element_type=f32)                  # (Cin, HW4)

    # --- Conv2d(3x3, pad=1) + InstanceNorm2d(affine=False) + LeakyReLU(0.01) -
    def conv_in_lrelu(feat, w_stk):
        # feat: (Cf, HW4) f32; w_stk: (Cout, 9*Cf) f32
        taps = []
        for t in range(9):                         # rolled taps, not im2col matrices
            dh, dw = t // 3 - 1, t % 3 - 1
            if dh == 0 and dw == 0:
                taps.append(feat)
            else:
                delta = dh * wp + dw
                s = pltpu.roll(feat, (-delta) % hw4, 1)
                taps.append(s * masks[t:t + 1, :])
        feat_stk = jnp.concatenate(taps, axis=0)                  # (9*Cf, HW4)
        acc = jnp.dot(w_stk, feat_stk, preferred_element_type=f32)  # (Cout, HW4)
        cout = acc.shape[0]
        # Conv2d bias omitted: exactly cancelled by the mean subtraction below.
        stats = jnp.concatenate([acc, acc * acc], axis=0)         # one XLU reduce
        mom = jnp.sum(stats, axis=1, keepdims=True) * (1.0 / hw4)
        mean, meansq = mom[:cout], mom[cout:]
        var = jnp.maximum(meansq - mean * mean, 0.0)
        y = (acc - mean) * lax.rsqrt(var + 1e-5)
        return jnp.where(y > 0, y, 0.01 * y)

    h1 = conv_in_lrelu(pooled, w1_ref[...])                       # (C1, HW4)
    h2 = conv_in_lrelu(h1, w2_ref[...])                           # (C1, HW4)

    # --- ConvTranspose2d(k=2, s=2): one stacked tap matmul + one fused scatter
    taps = jnp.dot(wt_ref[...], h2, preferred_element_type=f32)   # (4*Cin, HW4)
    tapcat = jnp.concatenate(
        [taps[t * cin:(t + 1) * cin, :] for t in range(4)], axis=1)  # (Cin, 4*HW4)
    up = jnp.dot(tapcat.astype(bf16), scat_ref[...],
                 preferred_element_type=f32) + bt_ref[...]        # (Cin, HW)

    # --- skip connection: out = cat([x, crop(up)], channel); crop == identity.
    o_ref[0, :, :] = jnp.concatenate([x, up], axis=0)             # (2*Cin, HW) store


# ----------------------- host-side constant matrices -------------------------

def _make_index_matrices(h, w):
    """Small 0/1 constants: pool even-index gather, conv boundary masks, and
    the fused ConvTranspose stride-2 scatter."""
    hp, wp = h // 2, w // 2
    hw, hw4 = h * w, hp * wp
    q = np.arange(hw4)
    r, c = q // wp, q % wp
    base = (2 * r) * w + (2 * c)            # flat index of each window's top-left

    gpool = np.zeros((hw, hw4), np.float32)           # pool even-grid gather
    gpool[base, q] = 1.0

    masks = np.zeros((9, hw4), np.float32)            # conv-roll zero-pad masks
    for t in range(9):
        dh, dw = t // 3 - 1, t % 3 - 1
        ok = (r + dh >= 0) & (r + dh < hp) & (c + dw >= 0) & (c + dw < wp)
        masks[t, ok] = 1.0

    scat = np.zeros((4 * hw4, hw), np.float32)        # ConvT stride-2 placement
    for kh in range(2):
        for kw in range(2):
            t = 2 * kh + kw
            scat[t * hw4 + q, base + kh * w + kw] = 1.0

    return (jnp.asarray(gpool, jnp.bfloat16),
            jnp.asarray(masks, jnp.float32),
            jnp.asarray(scat, jnp.bfloat16))


# ------------------------------- Pallas wrapper ------------------------------

def unet_innermost_forward(x_nchw, w1, b1, w2, b2, wt, bt):
    """Innermost UnetSkipConnectionBlock forward.  Weights in PyTorch layouts:
    w1/w2: (Cout, Cin, 3, 3) OIHW; wt: (in=2*Cin, out=Cin, 2, 2); bt: (Cin,)."""
    del b1, b2  # cancelled exactly by InstanceNorm2d(affine=False) mean subtraction
    n, cin, h, w = x_nchw.shape
    c1 = w1.shape[0]
    hp, wp = h // 2, w // 2
    hw, hw4 = h * w, hp * wp

    x2 = x_nchw.reshape(n, cin, hw).astype(jnp.float32)            # free reshape
    # Stack the 9 (or 4) taps into the contraction / M axis of one matmul each.
    w1_stk = jnp.transpose(w1, (0, 2, 3, 1)).reshape(c1, 9 * cin).astype(jnp.float32)
    w2_stk = jnp.transpose(w2, (0, 2, 3, 1)).reshape(c1, 9 * c1).astype(jnp.float32)
    wt_stk = jnp.transpose(wt, (2, 3, 1, 0)).reshape(4 * cin, c1).astype(jnp.float32)
    bt_c = bt.reshape(cin, 1).astype(jnp.float32)
    gpool, masks, scat = _make_index_matrices(h, w)

    kernel = functools.partial(unet_inner_kernel, hp=hp, wp=wp)

    mm_flops = (
        2 * cin * hw * hw4              # pool even-index gather
        + 2 * c1 * (9 * cin) * hw4      # conv1 stacked-tap matmul
        + 2 * c1 * (9 * c1) * hw4       # conv2 stacked-tap matmul
        + 2 * (4 * cin) * c1 * hw4      # ConvT tap matmul
        + 2 * cin * (4 * hw4) * hw      # ConvT fused scatter
    )
    vpu_flops = 64 * c1 * hw4           # rolls / masks / maxes / norm / lrelu (rough)
    cost = pl.CostEstimate(
        flops=int(n * (mm_flops + vpu_flops)),
        transcendentals=int(n * 2 * c1),
        bytes_accessed=int(4 * (n * cin * hw + n * 2 * cin * hw
                                + w1_stk.size + w2_stk.size + wt_stk.size
                                + bt_c.size + masks.size)
                           + 2 * (gpool.size + scat.size)),
    )

    const2 = lambda i: (0, 0)           # constant block index -> DMA'd only once
    out_flat = pl.pallas_call(
        kernel,
        out_shape=jax.ShapeDtypeStruct((n, 2 * cin, hw), jnp.float32),
        grid=(n,),
        in_specs=[
            pl.BlockSpec((1, cin, hw), lambda i: (i, 0, 0)),       # one sample / step
            pl.BlockSpec((c1, 9 * cin), const2),
            pl.BlockSpec((c1, 9 * c1), const2),
            pl.BlockSpec((4 * cin, c1), const2),
            pl.BlockSpec((cin, 1), const2),
            pl.BlockSpec((9, hw4), const2),
            pl.BlockSpec((hw, hw4), const2),
            pl.BlockSpec((4 * hw4, hw), const2),
        ],
        out_specs=pl.BlockSpec((1, 2 * cin, hw), lambda i: (i, 0, 0)),
        compiler_params=pltpu.CompilerParams(
            dimension_semantics=("parallel",)),                    # batch across TCs
        cost_estimate=cost,
    )(x2, w1_stk, w2_stk, wt_stk, bt_c, masks, gpool, scat)
    return out_flat.reshape(n, 2 * cin, h, w)


# ----------------------------- pure-JAX reference ----------------------------

def reference_forward(x, w1, b1, w2, b2, wt, bt):
    n, cin, h, w = x.shape
    xf = x.astype(jnp.float32)
    p = xf.reshape(n, cin, h // 2, 2, w // 2, 2).max(axis=(3, 5))

    def conv_block(z, w_oihw, b):
        y = lax.conv_general_dilated(
            z, w_oihw, window_strides=(1, 1), padding="SAME",
            dimension_numbers=("NCHW", "OIHW", "NCHW")) + b[None, :, None, None]
        m = y.mean(axis=(2, 3), keepdims=True)
        v = ((y - m) ** 2).mean(axis=(2, 3), keepdims=True)
        y = (y - m) / jnp.sqrt(v + 1e-5)
        return jnp.where(y > 0, y, 0.01 * y)

    z = conv_block(p, w1, b1)
    z = conv_block(z, w2, b2)
    up = jnp.einsum("nchw,cokl->nohkwl", z, wt)                    # 2x2 tap interleave
    up = up.reshape(n, cin, h, w) + bt[None, :, None, None]
    return jnp.concatenate([xf, up], axis=1)


# ------------------------------------ main -----------------------------------

if __name__ == "__main__":
    N, Cin, H, W = 2, 4, 16, 16
    Cout = 2 * Cin  # innermost UNet block requires out_channels == 2 * in_channels

    key = jax.random.PRNGKey(0)
    ks = jax.random.split(key, 7)
    x = jax.random.normal(ks[0], (N, Cin, H, W), jnp.float32)
    # Conv weights in PyTorch OIHW layout.
    w1 = jax.random.normal(ks[1], (Cout, Cin, 3, 3), jnp.float32) * 0.2
    b1 = jax.random.normal(ks[2], (Cout,), jnp.float32) * 0.05
    w2 = jax.random.normal(ks[3], (Cout, Cout, 3, 3), jnp.float32) * 0.2
    b2 = jax.random.normal(ks[4], (Cout,), jnp.float32) * 0.05
    # ConvTranspose2d weight in PyTorch layout (in_channels, out_channels, kH, kW).
    wt = jax.random.normal(ks[5], (Cout, Cin, 2, 2), jnp.float32) * 0.2
    bt = jax.random.normal(ks[6], (Cin,), jnp.float32) * 0.05

    fwd = jax.jit(unet_innermost_forward)
    out = jax.block_until_ready(fwd(x, w1, b1, w2, b2, wt, bt))
    assert out.shape == (N, 2 * Cin, H, W), out.shape

    ref = reference_forward(x, w1, b1, w2, b2, wt, bt)
    # The skip half is a pure f32 pass-through and must be bit-exact.
    assert bool(jnp.array_equal(out[:, :Cin], x)), "skip half must be exact"
    # The bf16 MXU path (pool gather / ConvT scatter feature operands) adds
    # ~1e-2 worst-case rounding on O(1) activations; any layout / roll /
    # indexing bug would produce O(0.1 .. 1) errors and is still caught.
    err = float(jnp.max(jnp.abs(out - ref)))
    assert err < 5e-2, f"max abs err {err}"

    print("KERNEL_OK")
</pallas_src>

<mosaic_0001>
module attributes {stable_mosaic.version = 11 : i64} {
  func.func @unet_inner_kernel(%arg0: i32, %arg1: memref<1x4x256xf32, #tpu.memory_space<vmem>>, %arg2: memref<8x36xf32, #tpu.memory_space<vmem>>, %arg3: memref<8x72xf32, #tpu.memory_space<vmem>>, %arg4: memref<16x8xf32, #tpu.memory_space<vmem>>, %arg5: memref<4x1xf32, #tpu.memory_space<vmem>>, %arg6: memref<9x64xf32, #tpu.memory_space<vmem>>, %arg7: memref<256x64xbf16, #tpu.memory_space<vmem>>, %arg8: memref<256x256xbf16, #tpu.memory_space<vmem>>, %arg9: memref<1x8x256xf32, #tpu.memory_space<vmem>>) attributes {dimension_semantics = [#tpu.dimension_semantics<parallel>], iteration_bounds = array<i64: 2>, scalar_prefetch = 0 : i64, scratch_operands = 0 : i64, tpu.core_type = #tpu.core_type<tc>, window_params = [{transform_indices = @transform_0, window_bounds = array<i64: 1, 4, 256>}, {pipeline_mode = #tpu.pipeline_mode<synchronous>, transform_indices = @transform_1, window_bounds = array<i64: 8, 36>}, {pipeline_mode = #tpu.pipeline_mode<synchronous>, transform_indices = @transform_2, window_bounds = array<i64: 8, 72>}, {pipeline_mode = #tpu.pipeline_mode<synchronous>, transform_indices = @transform_3, window_bounds = array<i64: 16, 8>}, {pipeline_mode = #tpu.pipeline_mode<synchronous>, transform_indices = @transform_4, window_bounds = array<i64: 4, 1>}, {pipeline_mode = #tpu.pipeline_mode<synchronous>, transform_indices = @transform_5, window_bounds = array<i64: 9, 64>}, {pipeline_mode = #tpu.pipeline_mode<synchronous>, transform_indices = @transform_6, window_bounds = array<i64: 256, 64>}, {pipeline_mode = #tpu.pipeline_mode<synchronous>, transform_indices = @transform_7, window_bounds = array<i64: 256, 256>}, {transform_indices = @transform_8, window_bounds = array<i64: 1, 8, 256>}]} {
    %c0 = arith.constant 0 : index
    %c0_0 = arith.constant 0 : index
    %c0_1 = arith.constant 0 : index
    %0 = vector.load %arg1[%c0, %c0_0, %c0_1] : memref<1x4x256xf32, #tpu.memory_space<vmem>>, vector<1x4x256xf32>
    %1 = vector.shape_cast %0 : vector<1x4x256xf32> to vector<4x256xf32>
    %c0_2 = arith.constant 0 : index
    %c0_3 = arith.constant 0 : index
    %2 = vector.load %arg6[%c0_2, %c0_3] : memref<9x64xf32, #tpu.memory_space<vmem>>, vector<9x64xf32>
    %c255_i32 = arith.constant 255 : i32
    %3 = tpu.dynamic_rotate %1 by %c255_i32 dim 1 : vector<4x256xf32>, i32 -> vector<4x256xf32>
    %4 = arith.maximumf %1, %3 : vector<4x256xf32>
    %c240_i32 = arith.constant 240 : i32
    %5 = tpu.dynamic_rotate %4 by %c240_i32 dim 1 : vector<4x256xf32>, i32 -> vector<4x256xf32>
    %6 = arith.maximumf %4, %5 : vector<4x256xf32>
    %7 = arith.truncf %6 : vector<4x256xf32> to vector<4x256xbf16>
    %c0_4 = arith.constant 0 : index
    %c0_5 = arith.constant 0 : index
    %8 = vector.load %arg7[%c0_4, %c0_5] : memref<256x64xbf16, #tpu.memory_space<vmem>>, vector<256x64xbf16>
    %cst = arith.constant dense<0.000000e+00> : vector<4x64xf32>
    %9 = tpu.matmul %7, %8, %cst {dimension_numbers = #tpu.dot_dimension_numbers<[1], [0], [0], [1], [0, 0, 1, 1], [], []>} : vector<4x256xbf16>, vector<256x64xbf16>, vector<4x64xf32> -> vector<4x64xf32>
    %c0_6 = arith.constant 0 : index
    %c0_7 = arith.constant 0 : index
    %10 = vector.load %arg2[%c0_6, %c0_7] : memref<8x36xf32, #tpu.memory_space<vmem>>, vector<8x36xf32>
    %c9_i32 = arith.constant 9 : i32
    %11 = tpu.dynamic_rotate %9 by %c9_i32 dim 1 : vector<4x64xf32>, i32 -> vector<4x64xf32>
    %12 = vector.extract_strided_slice %2 {offsets = [0, 0], sizes = [1, 64], strides = [1, 1]} : vector<9x64xf32> to vector<1x64xf32>
    %13 = vector.broadcast %12 : vector<1x64xf32> to vector<4x64xf32>
    %14 = arith.mulf %11, %13 : vector<4x64xf32>
    %c8_i32 = arith.constant 8 : i32
    %15 = tpu.dynamic_rotate %9 by %c8_i32 dim 1 : vector<4x64xf32>, i32 -> vector<4x64xf32>
    %16 = vector.extract_strided_slice %2 {offsets = [1, 0], sizes = [1, 64], strides = [1, 1]} : vector<9x64xf32> to vector<1x64xf32>
    %17 = vector.broadcast %16 : vector<1x64xf32> to vector<4x64xf32>
    %18 = arith.mulf %15, %17 : vector<4x64xf32>
    %c7_i32 = arith.constant 7 : i32
    %19 = tpu.dynamic_rotate %9 by %c7_i32 dim 1 : vector<4x64xf32>, i32 -> vector<4x64xf32>
    %20 = vector.extract_strided_slice %2 {offsets = [2, 0], sizes = [1, 64], strides = [1, 1]} : vector<9x64xf32> to vector<1x64xf32>
    %21 = vector.broadcast %20 : vector<1x64xf32> to vector<4x64xf32>
    %22 = arith.mulf %19, %21 : vector<4x64xf32>
    %c1_i32 = arith.constant 1 : i32
    %23 = tpu.dynamic_rotate %9 by %c1_i32 dim 1 : vector<4x64xf32>, i32 -> vector<4x64xf32>
    %24 = vector.extract_strided_slice %2 {offsets = [3, 0], sizes = [1, 64], strides = [1, 1]} : vector<9x64xf32> to vector<1x64xf32>
    %25 = vector.broadcast %24 : vector<1x64xf32> to vector<4x64xf32>
    %26 = arith.mulf %23, %25 : vector<4x64xf32>
    %c63_i32 = arith.constant 63 : i32
    %27 = tpu.dynamic_rotate %9 by %c63_i32 dim 1 : vector<4x64xf32>, i32 -> vector<4x64xf32>
    %28 = vector.extract_strided_slice %2 {offsets = [5, 0], sizes = [1, 64], strides = [1, 1]} : vector<9x64xf32> to vector<1x64xf32>
    %29 = vector.broadcast %28 : vector<1x64xf32> to vector<4x64xf32>
    %30 = arith.mulf %27, %29 : vector<4x64xf32>
    %c57_i32 = arith.constant 57 : i32
    %31 = tpu.dynamic_rotate %9 by %c57_i32 dim 1 : vector<4x64xf32>, i32 -> vector<4x64xf32>
    %32 = vector.extract_strided_slice %2 {offsets = [6, 0], sizes = [1, 64], strides = [1, 1]} : vector<9x64xf32> to vector<1x64xf32>
    %33 = vector.broadcast %32 : vector<1x64xf32> to vector<4x64xf32>
    %34 = arith.mulf %31, %33 : vector<4x64xf32>
    %c56_i32 = arith.constant 56 : i32
    %35 = tpu.dynamic_rotate %9 by %c56_i32 dim 1 : vector<4x64xf32>, i32 -> vector<4x64xf32>
    %36 = vector.extract_strided_slice %2 {offsets = [7, 0], sizes = [1, 64], strides = [1, 1]} : vector<9x64xf32> to vector<1x64xf32>
    %37 = vector.broadcast %36 : vector<1x64xf32> to vector<4x64xf32>
    %38 = arith.mulf %35, %37 : vector<4x64xf32>
    %c55_i32 = arith.constant 55 : i32
    %39 = tpu.dynamic_rotate %9 by %c55_i32 dim 1 : vector<4x64xf32>, i32 -> vector<4x64xf32>
    %40 = vector.extract_strided_slice %2 {offsets = [8, 0], sizes = [1, 64], strides = [1, 1]} : vector<9x64xf32> to vector<1x64xf32>
    %41 = vector.broadcast %40 : vector<1x64xf32> to vector<4x64xf32>
    %42 = arith.mulf %39, %41 : vector<4x64xf32>
    %43 = tpu.concatenate %14, %18, %22, %26, %9, %30, %34, %38, %42 in 0 : vector<4x64xf32>, vector<4x64xf32>, vector<4x64xf32>, vector<4x64xf32>, vector<4x64xf32>, vector<4x64xf32>, vector<4x64xf32>, vector<4x64xf32>, vector<4x64xf32> -> vector<36x64xf32>
    %cst_8 = arith.constant dense<0.000000e+00> : vector<8x64xf32>
    %44 = tpu.matmul %10, %43, %cst_8 {dimension_numbers = #tpu.dot_dimension_numbers<[1], [0], [0], [1], [0, 0, 1, 1], [], []>} : vector<8x36xf32>, vector<36x64xf32>, vector<8x64xf32> -> vector<8x64xf32>
    %45 = arith.mulf %44, %44 : vector<8x64xf32>
    %46 = tpu.concatenate %44, %45 in 0 : vector<8x64xf32>, vector<8x64xf32> -> vector<16x64xf32>
    %cst_9 = arith.constant dense<0.000000e+00> : vector<16xf32>
    %47 = vector.multi_reduction <add>, %46, %cst_9 [1] : vector<16x64xf32> to vector<16xf32>
    %48 = vector.shape_cast %47 : vector<16xf32> to vector<16x1xf32>
    %cst_10 = arith.constant 1.562500e-02 : f32
    %49 = vector.broadcast %cst_10 : f32 to vector<16x1xf32>
    %50 = arith.mulf %48, %49 : vector<16x1xf32>
    %51 = vector.extract_strided_slice %50 {offsets = [0, 0], sizes = [8, 1], strides = [1, 1]} : vector<16x1xf32> to vector<8x1xf32>
    %52 = vector.extract_strided_slice %50 {offsets = [8, 0], sizes = [8, 1], strides = [1, 1]} : vector<16x1xf32> to vector<8x1xf32>
    %53 = arith.mulf %51, %51 : vector<8x1xf32>
    %54 = arith.subf %52, %53 : vector<8x1xf32>
    %cst_11 = arith.constant 0.000000e+00 : f32
    %55 = vector.broadcast %cst_11 : f32 to vector<8x1xf32>
    %56 = arith.maximumf %54, %55 : vector<8x1xf32>
    %57 = vector.broadcast %51 : vector<8x1xf32> to vector<8x64xf32>
    %58 = arith.subf %44, %57 : vector<8x64xf32>
    %cst_12 = arith.constant 9.99999974E-6 : f32
    %59 = vector.broadcast %cst_12 : f32 to vector<8x1xf32>
    %60 = arith.addf %56, %59 : vector<8x1xf32>
    %61 = math.rsqrt %60 : vector<8x1xf32>
    %62 = vector.broadcast %61 : vector<8x1xf32> to vector<8x64xf32>
    %63 = arith.mulf %58, %62 : vector<8x64xf32>
    %cst_13 = arith.constant 0.000000e+00 : f32
    %64 = vector.broadcast %cst_13 : f32 to vector<8x64xf32>
    %65 = arith.cmpf ogt, %63, %64 : vector<8x64xf32>
    %cst_14 = arith.constant 0.00999999977 : f32
    %66 = vector.broadcast %cst_14 : f32 to vector<8x64xf32>
    %67 = arith.mulf %66, %63 : vector<8x64xf32>
    %68 = arith.select %65, %63, %67 : vector<8x64xi1>, vector<8x64xf32>
    %c0_15 = arith.constant 0 : index
    %c0_16 = arith.constant 0 : index
    %69 = vector.load %arg3[%c0_15, %c0_16] : memref<8x72xf32, #tpu.memory_space<vmem>>, vector<8x72xf32>
    %c9_i32_17 = arith.constant 9 : i32
    %70 = tpu.dynamic_rotate %68 by %c9_i32_17 dim 1 : vector<8x64xf32>, i32 -> vector<8x64xf32>
    %71 = vector.extract_strided_slice %2 {offsets = [0, 0], sizes = [1, 64], strides = [1, 1]} : vector<9x64xf32> to vector<1x64xf32>
    %72 = vector.broadcast %71 : vector<1x64xf32> to vector<8x64xf32>
    %73 = arith.mulf %70, %72 : vector<8x64xf32>
    %c8_i32_18 = arith.constant 8 : i32
    %74 = tpu.dynamic_rotate %68 by %c8_i32_18 dim 1 : vector<8x64xf32>, i32 -> vector<8x64xf32>
    %75 = vector.extract_strided_slice %2 {offsets = [1, 0], sizes = [1, 64], strides = [1, 1]} : vector<9x64xf32> to vector<1x64xf32>
    %76 = vector.broadcast %75 : vector<1x64xf32> to vector<8x64xf32>
    %77 = arith.mulf %74, %76 : vector<8x64xf32>
    %c7_i32_19 = arith.constant 7 : i32
    %78 = tpu.dynamic_rotate %68 by %c7_i32_19 dim 1 : vector<8x64xf32>, i32 -> vector<8x64xf32>
    %79 = vector.extract_strided_slice %2 {offsets = [2, 0], sizes = [1, 64], strides = [1, 1]} : vector<9x64xf32> to vector<1x64xf32>
    %80 = vector.broadcast %79 : vector<1x64xf32> to vector<8x64xf32>
    %81 = arith.mulf %78, %80 : vector<8x64xf32>
    %c1_i32_20 = arith.constant 1 : i32
    %82 = tpu.dynamic_rotate %68 by %c1_i32_20 dim 1 : vector<8x64xf32>, i32 -> vector<8x64xf32>
    %83 = vector.extract_strided_slice %2 {offsets = [3, 0], sizes = [1, 64], strides = [1, 1]} : vector<9x64xf32> to vector<1x64xf32>
    %84 = vector.broadcast %83 : vector<1x64xf32> to vector<8x64xf32>
    %85 = arith.mulf %82, %84 : vector<8x64xf32>
    %c63_i32_21 = arith.constant 63 : i32
    %86 = tpu.dynamic_rotate %68 by %c63_i32_21 dim 1 : vector<8x64xf32>, i32 -> vector<8x64xf32>
    %87 = vector.extract_strided_slice %2 {offsets = [5, 0], sizes = [1, 64], strides = [1, 1]} : vector<9x64xf32> to vector<1x64xf32>
    %88 = vector.broadcast %87 : vector<1x64xf32> to vector<8x64xf32>
    %89 = arith.mulf %86, %88 : vector<8x64xf32>
    %c57_i32_22 = arith.constant 57 : i32
    %90 = tpu.dynamic_rotate %68 by %c57_i32_22 dim 1 : vector<8x64xf32>, i32 -> vector<8x64xf32>
    %91 = vector.extract_strided_slice %2 {offsets = [6, 0], sizes = [1, 64], strides = [1, 1]} : vector<9x64xf32> to vector<1x64xf32>
    %92 = vector.broadcast %91 : vector<1x64xf32> to vector<8x64xf32>
    %93 = arith.mulf %90, %92 : vector<8x64xf32>
    %c56_i32_23 = arith.constant 56 : i32
    %94 = tpu.dynamic_rotate %68 by %c56_i32_23 dim 1 : vector<8x64xf32>, i32 -> vector<8x64xf32>
    %95 = vector.extract_strided_slice %2 {offsets = [7, 0], sizes = [1, 64], strides = [1, 1]} : vector<9x64xf32> to vector<1x64xf32>
    %96 = vector.broadcast %95 : vector<1x64xf32> to vector<8x64xf32>
    %97 = arith.mulf %94, %96 : vector<8x64xf32>
    %c55_i32_24 = arith.constant 55 : i32
    %98 = tpu.dynamic_rotate %68 by %c55_i32_24 dim 1 : vector<8x64xf32>, i32 -> vector<8x64xf32>
    %99 = vector.extract_strided_slice %2 {offsets = [8, 0], sizes = [1, 64], strides = [1, 1]} : vector<9x64xf32> to vector<1x64xf32>
    %100 = vector.broadcast %99 : vector<1x64xf32> to vector<8x64xf32>
    %101 = arith.mulf %98, %100 : vector<8x64xf32>
    %102 = tpu.concatenate %73, %77, %81, %85, %68, %89, %93, %97, %101 in 0 : vector<8x64xf32>, vector<8x64xf32>, vector<8x64xf32>, vector<8x64xf32>, vector<8x64xf32>, vector<8x64xf32>, vector<8x64xf32>, vector<8x64xf32>, vector<8x64xf32> -> vector<72x64xf32>
    %cst_25 = arith.constant dense<0.000000e+00> : vector<8x64xf32>
    %103 = tpu.matmul %69, %102, %cst_25 {dimension_numbers = #tpu.dot_dimension_numbers<[1], [0], [0], [1], [0, 0, 1, 1], [], []>} : vector<8x72xf32>, vector<72x64xf32>, vector<8x64xf32> -> vector<8x64xf32>
    %104 = arith.mulf %103, %103 : vector<8x64xf32>
    %105 = tpu.concatenate %103, %104 in 0 : vector<8x64xf32>, vector<8x64xf32> -> vector<16x64xf32>
    %cst_26 = arith.constant dense<0.000000e+00> : vector<16xf32>
    %106 = vector.multi_reduction <add>, %105, %cst_26 [1] : vector<16x64xf32> to vector<16xf32>
    %107 = vector.shape_cast %106 : vector<16xf32> to vector<16x1xf32>
    %cst_27 = arith.constant 1.562500e-02 : f32
    %108 = vector.broadcast %cst_27 : f32 to vector<16x1xf32>
    %109 = arith.mulf %107, %108 : vector<16x1xf32>
    %110 = vector.extract_strided_slice %109 {offsets = [0, 0], sizes = [8, 1], strides = [1, 1]} : vector<16x1xf32> to vector<8x1xf32>
    %111 = vector.extract_strided_slice %109 {offsets = [8, 0], sizes = [8, 1], strides = [1, 1]} : vector<16x1xf32> to vector<8x1xf32>
    %112 = arith.mulf %110, %110 : vector<8x1xf32>
    %113 = arith.subf %111, %112 : vector<8x1xf32>
    %cst_28 = arith.constant 0.000000e+00 : f32
    %114 = vector.broadcast %cst_28 : f32 to vector<8x1xf32>
    %115 = arith.maximumf %113, %114 : vector<8x1xf32>
    %116 = vector.broadcast %110 : vector<8x1xf32> to vector<8x64xf32>
    %117 = arith.subf %103, %116 : vector<8x64xf32>
    %cst_29 = arith.constant 9.99999974E-6 : f32
    %118 = vector.broadcast %cst_29 : f32 to vector<8x1xf32>
    %119 = arith.addf %115, %118 : vector<8x1xf32>
    %120 = math.rsqrt %119 : vector<8x1xf32>
    %121 = vector.broadcast %120 : vector<8x1xf32> to vector<8x64xf32>
    %122 = arith.mulf %117, %121 : vector<8x64xf32>
    %cst_30 = arith.constant 0.000000e+00 : f32
    %123 = vector.broadcast %cst_30 : f32 to vector<8x64xf32>
    %124 = arith.cmpf ogt, %122, %123 : vector<8x64xf32>
    %cst_31 = arith.constant 0.00999999977 : f32
    %125 = vector.broadcast %cst_31 : f32 to vector<8x64xf32>
    %126 = arith.mulf %125, %122 : vector<8x64xf32>
    %127 = arith.select %124, %122, %126 : vector<8x64xi1>, vector<8x64xf32>
    %c0_32 = arith.constant 0 : index
    %c0_33 = arith.constant 0 : index
    %128 = vector.load %arg4[%c0_32, %c0_33] : memref<16x8xf32, #tpu.memory_space<vmem>>, vector<16x8xf32>
    %cst_34 = arith.constant dense<0.000000e+00> : vector<16x64xf32>
    %129 = tpu.matmul %128, %127, %cst_34 {dimension_numbers = #tpu.dot_dimension_numbers<[1], [0], [0], [1], [0, 0, 1, 1], [], []>} : vector<16x8xf32>, vector<8x64xf32>, vector<16x64xf32> -> vector<16x64xf32>
    %130 = vector.extract_strided_slice %129 {offsets = [0, 0], sizes = [4, 64], strides = [1, 1]} : vector<16x64xf32> to vector<4x64xf32>
    %131 = vector.extract_strided_slice %129 {offsets = [4, 0], sizes = [4, 64], strides = [1, 1]} : vector<16x64xf32> to vector<4x64xf32>
    %132 = vector.extract_strided_slice %129 {offsets = [8, 0], sizes = [4, 64], strides = [1, 1]} : vector<16x64xf32> to vector<4x64xf32>
    %133 = vector.extract_strided_slice %129 {offsets = [12, 0], sizes = [4, 64], strides = [1, 1]} : vector<16x64xf32> to vector<4x64xf32>
    %134 = tpu.concatenate %130, %131, %132, %133 in 1 : vector<4x64xf32>, vector<4x64xf32>, vector<4x64xf32>, vector<4x64xf32> -> vector<4x256xf32>
    %135 = arith.truncf %134 : vector<4x256xf32> to vector<4x256xbf16>
    %c0_35 = arith.constant 0 : index
    %c0_36 = arith.constant 0 : index
    %136 = vector.load %arg8[%c0_35, %c0_36] : memref<256x256xbf16, #tpu.memory_space<vmem>>, vector<256x256xbf16>
    %cst_37 = arith.constant dense<0.000000e+00> : vector<4x256xf32>
    %137 = tpu.matmul %135, %136, %cst_37 {dimension_numbers = #tpu.dot_dimension_numbers<[1], [0], [0], [1], [0, 0, 1, 1], [], []>} : vector<4x256xbf16>, vector<256x256xbf16>, vector<4x256xf32> -> vector<4x256xf32>
    %c0_38 = arith.constant 0 : index
    %c0_39 = arith.constant 0 : index
    %138 = vector.load %arg5[%c0_38, %c0_39] : memref<4x1xf32, #tpu.memory_space<vmem>>, vector<4x1xf32>
    %139 = vector.broadcast %138 : vector<4x1xf32> to vector<4x256xf32>
    %140 = arith.addf %137, %139 : vector<4x256xf32>
    %141 = tpu.concatenate %1, %140 in 0 : vector<4x256xf32>, vector<4x256xf32> -> vector<8x256xf32>
    %c0_40 = arith.constant 0 : index
    %c0_41 = arith.constant 0 : index
    %c0_42 = arith.constant 0 : index
    %142 = vector.load %arg9[%c0_40, %c0_41, %c0_42] : memref<1x8x256xf32, #tpu.memory_space<vmem>>, vector<1x8x256xf32>
    %143 = vector.shape_cast %142 : vector<1x8x256xf32> to vector<8x256xf32>
    %144 = vector.shape_cast %141 : vector<8x256xf32> to vector<1x8x256xf32>
    tpu.vector_store %arg9[%c0_40, %c0_41, %c0_42], %144 {strides = array<i32>} : memref<1x8x256xf32, #tpu.memory_space<vmem>>, vector<1x8x256xf32>,
    return
  }
  func.func @transform_0(%arg0: i32) -> (i32, i32, i32) {
    %c0_i32 = arith.constant 0 : i32
    %c0_i32_0 = arith.constant 0 : i32
    %c0_i32_1 = arith.constant 0 : i32
    return %arg0, %c0_i32, %c0_i32_0 : i32, i32, i32
  }
  func.func @transform_1(%arg0: i32) -> (i32, i32) {
    %c0_i32 = arith.constant 0 : i32
    %c0_i32_0 = arith.constant 0 : i32
    %c0_i32_1 = arith.constant 0 : i32
    return %c0_i32, %c0_i32_0 : i32, i32
  }
  func.func @transform_2(%arg0: i32) -> (i32, i32) {
    %c0_i32 = arith.constant 0 : i32
    %c0_i32_0 = arith.constant 0 : i32
    %c0_i32_1 = arith.constant 0 : i32
    return %c0_i32, %c0_i32_0 : i32, i32
  }
  func.func @transform_3(%arg0: i32) -> (i32, i32) {
    %c0_i32 = arith.constant 0 : i32
    %c0_i32_0 = arith.constant 0 : i32
    %c0_i32_1 = arith.constant 0 : i32
    return %c0_i32, %c0_i32_0 : i32, i32
  }
  func.func @transform_4(%arg0: i32) -> (i32, i32) {
    %c0_i32 = arith.constant 0 : i32
    %c0_i32_0 = arith.constant 0 : i32
    %c0_i32_1 = arith.constant 0 : i32
    return %c0_i32, %c0_i32_0 : i32, i32
  }
  func.func @transform_5(%arg0: i32) -> (i32, i32) {
    %c0_i32 = arith.constant 0 : i32
    %c0_i32_0 = arith.constant 0 : i32
    %c0_i32_1 = arith.constant 0 : i32
    return %c0_i32, %c0_i32_0 : i32, i32
  }
  func.func @transform_6(%arg0: i32) -> (i32, i32) {
    %c0_i32 = arith.constant 0 : i32
    %c0_i32_0 = arith.constant 0 : i32
    %c0_i32_1 = arith.constant 0 : i32
    return %c0_i32, %c0_i32_0 : i32, i32
  }
  func.func @transform_7(%arg0: i32) -> (i32, i32) {
    %c0_i32 = arith.constant 0 : i32
    %c0_i32_0 = arith.constant 0 : i32
    %c0_i32_1 = arith.constant 0 : i32
    return %c0_i32, %c0_i32_0 : i32, i32
  }
  func.func @transform_8(%arg0: i32) -> (i32, i32, i32) {
    %c0_i32 = arith.constant 0 : i32
    %c0_i32_0 = arith.constant 0 : i32
    %c0_i32_1 = arith.constant 0 : i32
    return %arg0, %c0_i32, %c0_i32_0 : i32, i32, i32
  }
}

</mosaic_0001>

<llo_original>
// kernel: unet_innermost_forward.1
$region0: #{unet_innermost_forward.1}
  #allocation0 [shape = 'u32[]', space=smem, size = 0x4, offset = 0x4, fixed_abs, tag = 'smem constant byte address 0x4 - core index']
  #allocation1 [shape = 'u32[144,128]{1,0:T(1,128)}', space=vmem, size = 0x12000, scoped, tag = 'internal scratch']
  %s0 = inlined_call_operand.vmem [shape: f32[2,4,256], index: 0, kind: input, shape index: {}]
  %s1 = inlined_call_operand.vmem [shape: f32[8,36], index: 1, kind: input, shape index: {}]
  %s2 = inlined_call_operand.vmem [shape: f32[8,72], index: 2, kind: input, shape index: {}]
  %s3 = inlined_call_operand.vmem [shape: f32[16,8], index: 3, kind: input, shape index: {}]
  %s4 = inlined_call_operand.vmem [shape: f32[4,1], index: 4, kind: input, shape index: {}]
  %s5 = inlined_call_operand.vmem [shape: f32[9,64], index: 5, kind: input, shape index: {}]
  %s6 = inlined_call_operand.vmem [shape: bf16[256,64], index: 6, kind: input, shape index: {}]
  %s7 = inlined_call_operand.vmem [shape: bf16[256,256], index: 7, kind: input, shape index: {}]
  %s8 = inlined_call_operand.vmem [shape: f32[2,8,256], index: 8, kind: output, shape index: {}]
  %s9 = sld [smem:[#allocation0]]
  $region65: #{unet_innermost_forward.1} parent=0
    _
  %s11 = ssub.s32 1, %s9
  %s12 = scalar_select 0, %s11, %s9
  loop: start=0, step=1, limit=4
  $region2: #{unet_innermost_forward.1} parent=0 // loop_pre_header
    _
  $region3: #{unet_innermost_forward.1} parent=0 // loop_header
    %s14 = sphi 0, %s18
    %p15 = scmp.ge.s32.totalorder %s14, 4
    %s24 = sphi 0, %s26
    %s27 = sphi 0, %s24
    %s28 = sphi 0, %s27
    %s44 = sphi 0, %s28
    %s48 = sphi 0, %s48
    %s50 = sphi 0, %s48
    %s51 = sphi 0, %s50
    %s65 = sphi 0, %s51
    %s69 = sphi 0, %s69
    %s71 = sphi 0, %s69
    %s72 = sphi 0, %s71
    %s86 = sphi 0, %s72
    %s90 = sphi 0, %s90
    %s92 = sphi 0, %s90
    %s93 = sphi 0, %s92
    %s107 = sphi 0, %s93
    %s111 = sphi 0, %s111
    %s113 = sphi 0, %s111
    %s114 = sphi 0, %s113
    %s128 = sphi 0, %s114
    %s132 = sphi 0, %s132
    %s134 = sphi 0, %s132
    %s135 = sphi 0, %s134
    %s149 = sphi 0, %s135
    %s153 = sphi 0, %s153
    %s155 = sphi 0, %s153
    %s156 = sphi 0, %s155
    %s170 = sphi 0, %s156
    %s174 = sphi 0, %s174
    %s176 = sphi 0, %s174
    %s177 = sphi 0, %s176
    %s191 = sphi 0, %s177
    %s197 = sphi 0, %s199
    %s200 = sphi 0, %s197
    %s201 = sphi 0, %s200
    %s217 = sphi 0, %s201
  $region4: #{unet_innermost_forward.1} parent=0 // loop_header_branch
    %17 = sbr.rel (%p15) target = $region8
  $region5: #{unet_innermost_forward.1} parent=0 // loop_body
    %s19 = ssub.s32 %s14, 1
    %s20 = ssub.s32 %s14, 2
    %s21 = sadd.s32 %s14, 1
    %s22 = ssub.s32 %s14, %s21
    %p23 = scmp.eq.s32.totalorder %s22, 0
    %s25 = sadd.s32 %s24, 1
    %s26 = scalar_select %p23, %s24, %s25
    %p29 = pneg %p23
    %p30 = scmp.eq.s32.totalorder %s14, 1
    %p31 = por %p29, %p30
    %p32 = scmp.ne.s32.totalorder %s24, %s27
    %p33 = scmp.eq.s32.totalorder %s14, 0
    %p34 = por %p32, %p33
    %p35 = scmp.ne.s32.totalorder %s24, %s27
    %p36 = scmp.eq.s32.totalorder %s19, 1
    %p37 = por %p35, %p36
    %p38 = scmp.ne.s32.totalorder %s27, %s28
    %p39 = scmp.eq.s32.totalorder %s19, 0
    %p40 = por %p38, %p39
    %p41 = scmp.ne.s32.totalorder %s27, %s28
    %p42 = scmp.eq.s32.totalorder %s20, 1
    %p43 = por %p41, %p42
    %p45 = scmp.ne.s32.totalorder %s28, %s44
    %p46 = scmp.eq.s32.totalorder %s20, 0
    %p47 = por %p45, %p46
    %s49 = sadd.s32 %s48, 1
    %p52 = scmp.eq.s32.totalorder %s14, 1
    %p53 = scmp.ne.s32.totalorder %s48, %s50
    %p54 = scmp.eq.s32.totalorder %s14, 0
    %p55 = por %p53, %p54
    %p56 = scmp.ne.s32.totalorder %s48, %s50
    %p57 = scmp.eq.s32.totalorder %s19, 1
    %p58 = por %p56, %p57
    %p59 = scmp.ne.s32.totalorder %s50, %s51
    %p60 = scmp.eq.s32.totalorder %s19, 0
    %p61 = por %p59, %p60
    %p62 = scmp.ne.s32.totalorder %s50, %s51
    %p63 = scmp.eq.s32.totalorder %s20, 1
    %p64 = por %p62, %p63
    %p66 = scmp.ne.s32.totalorder %s51, %s65
    %p67 = scmp.eq.s32.totalorder %s20, 0
    %p68 = por %p66, %p67
    %s70 = sadd.s32 %s69, 1
    %p73 = scmp.eq.s32.totalorder %s14, 1
    %p74 = scmp.ne.s32.totalorder %s69, %s71
    %p75 = scmp.eq.s32.totalorder %s14, 0
    %p76 = por %p74, %p75
    %p77 = scmp.ne.s32.totalorder %s69, %s71
    %p78 = scmp.eq.s32.totalorder %s19, 1
    %p79 = por %p77, %p78
    %p80 = scmp.ne.s32.totalorder %s71, %s72
    %p81 = scmp.eq.s32.totalorder %s19, 0
    %p82 = por %p80, %p81
    %p83 = scmp.ne.s32.totalorder %s71, %s72
    %p84 = scmp.eq.s32.totalorder %s20, 1
    %p85 = por %p83, %p84
    %p87 = scmp.ne.s32.totalorder %s72, %s86
    %p88 = scmp.eq.s32.totalorder %s20, 0
    %p89 = por %p87, %p88
    %s91 = sadd.s32 %s90, 1
    %p94 = scmp.eq.s32.totalorder %s14, 1
    %p95 = scmp.ne.s32.totalorder %s90, %s92
    %p96 = scmp.eq.s32.totalorder %s14, 0
    %p97 = por %p95, %p96
    %p98 = scmp.ne.s32.totalorder %s90, %s92
    %p99 = scmp.eq.s32.totalorder %s19, 1
    %p100 = por %p98, %p99
    %p101 = scmp.ne.s32.totalorder %s92, %s93
    %p102 = scmp.eq.s32.totalorder %s19, 0
    %p103 = por %p101, %p102
    %p104 = scmp.ne.s32.totalorder %s92, %s93
    %p105 = scmp.eq.s32.totalorder %s20, 1
    %p106 = por %p104, %p105
    %p108 = scmp.ne.s32.totalorder %s93, %s107
    %p109 = scmp.eq.s32.totalorder %s20, 0
    %p110 = por %p108, %p109
    %s112 = sadd.s32 %s111, 1
    %p115 = scmp.eq.s32.totalorder %s14, 1
    %p116 = scmp.ne.s32.totalorder %s111, %s113
    %p117 = scmp.eq.s32.totalorder %s14, 0
    %p118 = por %p116, %p117
    %p119 = scmp.ne.s32.totalorder %s111, %s113
    %p120 = scmp.eq.s32.totalorder %s19, 1
    %p121 = por %p119, %p120
    %p122 = scmp.ne.s32.totalorder %s113, %s114
    %p123 = scmp.eq.s32.totalorder %s19, 0
    %p124 = por %p122, %p123
    %p125 = scmp.ne.s32.totalorder %s113, %s114
    %p126 = scmp.eq.s32.totalorder %s20, 1
    %p127 = por %p125, %p126
    %p129 = scmp.ne.s32.totalorder %s114, %s128
    %p130 = scmp.eq.s32.totalorder %s20, 0
    %p131 = por %p129, %p130
    %s133 = sadd.s32 %s132, 1
    %p136 = scmp.eq.s32.totalorder %s14, 1
    %p137 = scmp.ne.s32.totalorder %s132, %s134
    %p138 = scmp.eq.s32.totalorder %s14, 0
    %p139 = por %p137, %p138
    %p140 = scmp.ne.s32.totalorder %s132, %s134
    %p141 = scmp.eq.s32.totalorder %s19, 1
    %p142 = por %p140, %p141
    %p143 = scmp.ne.s32.totalorder %s134, %s135
    %p144 = scmp.eq.s32.totalorder %s19, 0
    %p145 = por %p143, %p144
    %p146 = scmp.ne.s32.totalorder %s134, %s135
    %p147 = scmp.eq.s32.totalorder %s20, 1
    %p148 = por %p146, %p147
    %p150 = scmp.ne.s32.totalorder %s135, %s149
    %p151 = scmp.eq.s32.totalorder %s20, 0
    %p152 = por %p150, %p151
    %s154 = sadd.s32 %s153, 1
    %p157 = scmp.eq.s32.totalorder %s14, 1
    %p158 = scmp.ne.s32.totalorder %s153, %s155
    %p159 = scmp.eq.s32.totalorder %s14, 0
    %p160 = por %p158, %p159
    %p161 = scmp.ne.s32.totalorder %s153, %s155
    %p162 = scmp.eq.s32.totalorder %s19, 1
    %p163 = por %p161, %p162
    %p164 = scmp.ne.s32.totalorder %s155, %s156
    %p165 = scmp.eq.s32.totalorder %s19, 0
    %p166 = por %p164, %p165
    %p167 = scmp.ne.s32.totalorder %s155, %s156
    %p168 = scmp.eq.s32.totalorder %s20, 1
    %p169 = por %p167, %p168
    %p171 = scmp.ne.s32.totalorder %s156, %s170
    %p172 = scmp.eq.s32.totalorder %s20, 0
    %p173 = por %p171, %p172
    %s175 = sadd.s32 %s174, 1
    %p178 = scmp.eq.s32.totalorder %s14, 1
    %p179 = scmp.ne.s32.totalorder %s174, %s176
    %p180 = scmp.eq.s32.totalorder %s14, 0
    %p181 = por %p179, %p180
    %p182 = scmp.ne.s32.totalorder %s174, %s176
    %p183 = scmp.eq.s32.totalorder %s19, 1
    %p184 = por %p182, %p183
    %p185 = scmp.ne.s32.totalorder %s176, %s177
    %p186 = scmp.eq.s32.totalorder %s19, 0
    %p187 = por %p185, %p186
    %p188 = scmp.ne.s32.totalorder %s176, %s177
    %p189 = scmp.eq.s32.totalorder %s20, 1
    %p190 = por %p188, %p189
    %p192 = scmp.ne.s32.totalorder %s177, %s191
    %p193 = scmp.eq.s32.totalorder %s20, 0
    %p194 = por %p192, %p193
    %s195 = ssub.s32 %s14, %s21
    %p196 = scmp.eq.s32.totalorder %s195, 0
    %s198 = sadd.s32 %s197, 1
    %s199 = scalar_select %p196, %s197, %s198
    %p202 = pneg %p196
    %p203 = scmp.eq.s32.totalorder %s14, 1
    %p204 = por %p202, %p203
    %p205 = scmp.ne.s32.totalorder %s197, %s200
    %p206 = scmp.eq.s32.totalorder %s14, 0
    %p207 = por %p205, %p206
    %p208 = scmp.ne.s32.totalorder %s197, %s200
    %p209 = scmp.eq.s32.totalorder %s19, 1
    %p210 = por %p208, %p209
    %p211 = scmp.ne.s32.totalorder %s200, %s201
    %p212 = scmp.eq.s32.totalorder %s19, 0
    %p213 = por %p211, %p212
    %p214 = scmp.ne.s32.totalorder %s200, %s201
    %p215 = scmp.eq.s32.totalorder %s20, 1
    %p216 = por %p214, %p215
    %p218 = scmp.ne.s32.totalorder %s201, %s217
    %p219 = scmp.eq.s32.totalorder %s20, 0
    %p220 = por %p218, %p219
    %p221 = scmp.le.s32.totalorder 1, %s14
    %p222 = scmp.lt.s32.totalorder %s14, 3
    %p223 = pnand %p221, %p222
    %p224 = pneg %p223
    // Predicated region
    $region9: #{unet_innermost_forward.1} parent=5 // pred_check
      _
    $region10: #{unet_innermost_forward.1} parent=5 // pred_check_branch
      %226 = sbr.rel (%p223) target = $region12
    $region11: #{unet_innermost_forward.1} parent=5 // pred_region
      %s227 = ssub.s32 %s14, 1
      // Predicated region
      $region13: #{unet_innermost_forward.1} parent=11 // pred_check
        %p228 = pneg %p61
      $region14: #{unet_innermost_forward.1} parent=11 // pred_check_branch
        %230 = sbr.rel (%p228) target = $region16
      $region15: #{unet_innermost_forward.1} parent=11 // pred_region
        _
      $region16: #{unet_innermost_forward.1} parent=11 // pred_fallthru
        _
      // Predicated region
      $region17: #{unet_innermost_forward.1} parent=11 // pred_check
        %p231 = pneg %p82
      $region18: #{unet_innermost_forward.1} parent=11 // pred_check_branch
        %233 = sbr.rel (%p231) target = $region20
      $region19: #{unet_innermost_forward.1} parent=11 // pred_region
        _
      $region20: #{unet_innermost_forward.1} parent=11 // pred_fallthru
        _
      // Predicated region
      $region21: #{unet_innermost_forward.1} parent=11 // pred_check
        %p234 = pneg %p103
      $region22: #{unet_innermost_forward.1} parent=11 // pred_check_branch
        %236 = sbr.rel (%p234) target = $region24
      $region23: #{unet_innermost_forward.1} parent=11 // pred_region
        _
      $region24: #{unet_innermost_forward.1} parent=11 // pred_fallthru
        _
      // Predicated region
      $region25: #{unet_innermost_forward.1} parent=11 // pred_check
        %p237 = pneg %p124
      $region26: #{unet_innermost_forward.1} parent=11 // pred_check_branch
        %239 = sbr.rel (%p237) target = $region28
      $region27: #{unet_innermost_forward.1} parent=11 // pred_region
        _
      $region28: #{unet_innermost_forward.1} parent=11 // pred_fallthru
        _
      // Predicated region
      $region29: #{unet_innermost_forward.1} parent=11 // pred_check
        %p240 = pneg %p145
      $region30: #{unet_innermost_forward.1} parent=11 // pred_check_branch
        %242 = sbr.rel (%p240) target = $region32
      $region31: #{unet_innermost_forward.1} parent=11 // pred_region
        _
      $region32: #{unet_innermost_forward.1} parent=11 // pred_fallthru
        _
      // Predicated region
      $region33: #{unet_innermost_forward.1} parent=11 // pred_check
        %p243 = pneg %p166
      $region34: #{unet_innermost_forward.1} parent=11 // pred_check_branch
        %245 = sbr.rel (%p243) target = $region36
      $region35: #{unet_innermost_forward.1} parent=11 // pred_region
        _
      $region36: #{unet_innermost_forward.1} parent=11 // pred_fallthru
        _
      // Predicated region
      $region37: #{unet_innermost_forward.1} parent=11 // pred_check
        %p246 = pneg %p187
      $region38: #{unet_innermost_forward.1} parent=11 // pred_check_branch
        %248 = sbr.rel (%p246) target = $region40
      $region39: #{unet_innermost_forward.1} parent=11 // pred_region
        _
      $region40: #{unet_innermost_forward.1} parent=11 // pred_fallthru
        _
    $region12: #{unet_innermost_forward.1} parent=5 // pred_fallthru
      _
    %p249 = scmp.lt.s32.totalorder %s14, 2
    // Predicated region
    $region41: #{unet_innermost_forward.1} parent=5 // pred_check
      %p250 = pneg %p249
    $region42: #{unet_innermost_forward.1} parent=5 // pred_check_branch
      %252 = sbr.rel (%p250) target = $region44
    $region43: #{unet_innermost_forward.1} parent=5 // pred_region
      // Predicated region
      $region45: #{unet_innermost_forward.1} parent=43 // pred_check
        %p253 = pneg %p34
      $region46: #{unet_innermost_forward.1} parent=43 // pred_check_branch
        %255 = sbr.rel (%p253) target = $region48
      $region47: #{unet_innermost_forward.1} parent=43 // pred_region
        %p256 = scmp.lt.s32.totalorder %s14, 1
        %s257 = scalar_select %p256, %s14, 1
        %s258 = smul.addr %s257, 2
        %s259 = smul.addr %s258, 4
        %s260 = scalar_lea.vmem %s0, %s259
      $region48: #{unet_innermost_forward.1} parent=43 // pred_fallthru
        _
    $region44: #{unet_innermost_forward.1} parent=5 // pred_fallthru
      _
    %p261 = scmp.le.s32.totalorder 1, %s14
    %p262 = scmp.lt.s32.totalorder %s14, 3
    %p263 = pnand %p261, %p262
    %p264 = pneg %p263
    // Predicated region
    $region49: #{unet_innermost_forward.1} parent=5 // pred_check
      _
    $region50: #{unet_innermost_forward.1} parent=5 // pred_check_branch
      %266 = sbr.rel (%p263) target = $region52
    $region51: #{unet_innermost_forward.1} parent=5 // pred_region
      %s267 = ssub.s32 %s14, 1
      %p268 = scmp.lt.s32.totalorder %s19, 1
      %s269 = scalar_select %p268, %s19, 1
      %s270 = smul.addr %s269, 2
      %s271 = smul.addr %s270, 4
      %s272 = scalar_lea.vmem %s0, %s271
      %p273 = pneg %p40
      %p274 = pneg %p37
      %p275 = pneg %p61
      %p276 = pneg %p58
      %p277 = pneg %p82
      %p278 = pneg %p79
      %p279 = pneg %p103
      %p280 = pneg %p100
      %p281 = pneg %p124
      %p282 = pneg %p121
      %p283 = pneg %p145
      %p284 = pneg %p142
      %p285 = pneg %p166
      %p286 = pneg %p163
      %p287 = pneg %p187
      %p288 = pneg %p184
      %p289 = pneg %p213
      %p290 = pneg %p210
      %p291 = scmp.lt.s32.totalorder %s19, 1
      %s292 = scalar_select %p291, %s19, 1
      %s293 = smul.addr %s292, 2
      %s294 = smul.addr %s293, 8
      %s295 = scalar_lea.vmem %s8, %s294
      %p296 = scmp.lt.s32.totalorder %s19, 1
      %s297 = scalar_select %p296, %s19, 1
      %s298 = smul.addr %s297, 2
      %s299 = smul.addr %s298, 4
      %s300 = scalar_lea.vmem %s0, %s299
      %p301 = scmp.lt.s32.totalorder %s19, 1
      %s302 = scalar_select %p301, %s19, 1
      %s303 = smul.addr %s302, 2
      %s304 = smul.addr %s303, 8
      %s305 = scalar_lea.vmem %s8, %s304
      %v307 = vld [vmem:[%s300] sm:$0xff]
      %v308 = vld [vmem:[%s5] sm:$0xff]
      %v309 = vld [vmem:[%s5 + $0x8] sm:$0x1]
      %v311 = vcombine.high %v307, %v307
      %313 = vrot.lane.b32.xlu0 %v307, 127
      %v314 = vpop.permute.xlu0 %313
      %315 = vrot.lane.b32.xlu0 %v311, 127
      %v316 = vpop.permute.xlu0 %315
      %v317 = vlaneseq
      %v318 = vand.u32 %v317, 127
      %vm319 = vcmp.lt.s32.totalorder %v318, 127
      %v320 = vsel %vm319, %v314, %v316
      %v321 = vsel %vm319, %v316, %v314
      %v324 = vcombine.low %v320, %v321
      %v326 = vmax.f32 %v307, %v324
      %v328 = vcombine.high %v326, %v326
      %330 = vrot.lane.b32.xlu0 %v326, 112
      %v331 = vpop.permute.xlu0 %330
      %332 = vrot.lane.b32.xlu0 %v328, 112
      %v333 = vpop.permute.xlu0 %332
      %vm334 = vcmp.lt.s32.totalorder %v318, 112
      %v335 = vsel %vm334, %v331, %v333
      %v336 = vsel %vm334, %v333, %v331
      %v339 = vcombine.low %v335, %v336
      %v341 = vmax.f32 %v326, %v339
      %v343 = vcombine.high %v341, %v341
      %v345 = vpack.c.bf16 %v341, %v341
      %v346 = vpack.c.bf16 %v343, %v343
      %v347 = vld [vmem:[%s6] sm:$0xf]
      %v348 = vld [vmem:[%s6 + $0x4] sm:$0xf]
      %v349 = vld [vmem:[%s6 + $0x8] sm:$0xf]
      %v350 = vld [vmem:[%s6 + $0xc] sm:$0xf]
      %v351 = vld [vmem:[%s6 + $0x10] sm:$0xf]
      %v352 = vld [vmem:[%s6 + $0x14] sm:$0xf]
      %v353 = vld [vmem:[%s6 + $0x18] sm:$0xf]
      %v354 = vld [vmem:[%s6 + $0x1c] sm:$0xf]
      %v355 = vld [vmem:[%s6 + $0x20] sm:$0xf]
      %v356 = vld [vmem:[%s6 + $0x24] sm:$0xf]
      %v357 = vld [vmem:[%s6 + $0x28] sm:$0xf]
      %v358 = vld [vmem:[%s6 + $0x2c] sm:$0xf]
      %v359 = vld [vmem:[%s6 + $0x30] sm:$0xf]
      %v360 = vld [vmem:[%s6 + $0x34] sm:$0xf]
      %v361 = vld [vmem:[%s6 + $0x38] sm:$0xf]
      %v362 = vld [vmem:[%s6 + $0x3c] sm:$0xf]
      %v363 = vld [vmem:[%s6 + $0x40] sm:$0xf]
      %v364 = vld [vmem:[%s6 + $0x44] sm:$0xf]
      %v365 = vld [vmem:[%s6 + $0x48] sm:$0xf]
      %v366 = vld [vmem:[%s6 + $0x4c] sm:$0xf]
      %v367 = vld [vmem:[%s6 + $0x50] sm:$0xf]
      %v368 = vld [vmem:[%s6 + $0x54] sm:$0xf]
      %v369 = vld [vmem:[%s6 + $0x58] sm:$0xf]
      %v370 = vld [vmem:[%s6 + $0x5c] sm:$0xf]
      %v371 = vld [vmem:[%s6 + $0x60] sm:$0xf]
      %v372 = vld [vmem:[%s6 + $0x64] sm:$0xf]
      %v373 = vld [vmem:[%s6 + $0x68] sm:$0xf]
      %v374 = vld [vmem:[%s6 + $0x6c] sm:$0xf]
      %v375 = vld [vmem:[%s6 + $0x70] sm:$0xf]
      %v376 = vld [vmem:[%s6 + $0x74] sm:$0xf]
      %v377 = vld [vmem:[%s6 + $0x78] sm:$0xf]
      %v378 = vld [vmem:[%s6 + $0x7c] sm:$0xf]
      %v411 = vunpack.c.l.b16 %v347
      %v412 = vunpack.c.l.b16 %v348
      %v413 = vunpack.c.l.b16 %v349
      %v414 = vunpack.c.l.b16 %v350
      %v415 = vunpack.c.l.b16 %v351
      %v416 = vunpack.c.l.b16 %v352
      %v417 = vunpack.c.l.b16 %v353
      %v418 = vunpack.c.l.b16 %v354
      %v419 = vunpack.c.l.b16 %v355
      %v420 = vunpack.c.l.b16 %v356
      %v421 = vunpack.c.l.b16 %v357
      %v422 = vunpack.c.l.b16 %v358
      %v423 = vunpack.c.l.b16 %v359
      %v424 = vunpack.c.l.b16 %v360
      %v425 = vunpack.c.l.b16 %v361
      %v426 = vunpack.c.l.b16 %v362
      %v427 = vunpack.c.l.b16 %v363
      %v428 = vunpack.c.l.b16 %v364
      %v429 = vunpack.c.l.b16 %v365
      %v430 = vunpack.c.l.b16 %v366
      %v431 = vunpack.c.l.b16 %v367
      %v432 = vunpack.c.l.b16 %v368
      %v433 = vunpack.c.l.b16 %v369
      %v434 = vunpack.c.l.b16 %v370
      %v435 = vunpack.c.l.b16 %v371
      %v436 = vunpack.c.l.b16 %v372
      %v437 = vunpack.c.l.b16 %v373
      %v438 = vunpack.c.l.b16 %v374
      %v439 = vunpack.c.l.b16 %v375
      %v440 = vunpack.c.l.b16 %v376
      %v441 = vunpack.c.l.b16 %v377
      %v442 = vunpack.c.l.b16 %v378
      %v443 = vpack.c.b16 %v412, %v411
      %v444 = vpack.c.b16 %v414, %v413
      %v445 = vpack.c.b16 %v416, %v415
      %v446 = vpack.c.b16 %v418, %v417
      %v447 = vpack.c.b16 %v420, %v419
      %v448 = vpack.c.b16 %v422, %v421
      %v449 = vpack.c.b16 %v424, %v423
      %v450 = vpack.c.b16 %v426, %v425
      %v451 = vpack.c.b16 %v428, %v427
      %v452 = vpack.c.b16 %v430, %v429
      %v453 = vpack.c.b16 %v432, %v431
      %v454 = vpack.c.b16 %v434, %v433
      %v455 = vpack.c.b16 %v436, %v435
      %v456 = vpack.c.b16 %v438, %v437
      %v457 = vpack.c.b16 %v440, %v439
      %v458 = vpack.c.b16 %v442, %v441
      %475 = vmatprep.subr.bf16.mxu0 0
      %476 = vmatpush1.bf16.msra.mxu0 %v450
      %477 = vmatprep.subr.bf16.mxu0 0
      %478 = vmatpush1.bf16.msra.mxu0 %v449
      %479 = vmatprep.subr.bf16.mxu0 0
      %480 = vmatpush1.bf16.msra.mxu0 %v448
      %481 = vmatprep.subr.bf16.mxu0 0
      %482 = vmatpush1.bf16.msra.mxu0 %v447
      %483 = vmatprep.subr.bf16.mxu0 0
      %484 = vmatpush1.bf16.msra.mxu0 %v446
      %485 = vmatprep.subr.bf16.mxu0 0
      %486 = vmatpush1.bf16.msra.mxu0 %v445
      %487 = vmatprep.subr.bf16.mxu0 0
      %488 = vmatpush1.bf16.msra.mxu0 %v444
      %489 = vmatprep.subr.bf16.mxu0 0
      %490 = vmatpush1.bf16.msra.mxu0 %v443
      %491 = vmatprep.subr.bf16.mxu0 0
      %492 = vmatpush2.bf16.msra.mxu0 %v458
      %493 = vmatprep.subr.bf16.mxu0 0
      %494 = vmatpush2.bf16.msra.mxu0 %v457
      %495 = vmatprep.subr.bf16.mxu0 0
      %496 = vmatpush2.bf16.msra.mxu0 %v456
      %497 = vmatprep.subr.bf16.mxu0 0
      %498 = vmatpush2.bf16.msra.mxu0 %v455
      %499 = vmatprep.subr.bf16.mxu0 0
      %500 = vmatpush2.bf16.msra.mxu0 %v454
      %501 = vmatprep.subr.bf16.mxu0 0
      %502 = vmatpush2.bf16.msra.mxu0 %v453
      %503 = vmatprep.subr.bf16.mxu0 0
      %504 = vmatpush2.bf16.msra.mxu0 %v452
      %505 = vmatprep.subr.bf16.mxu0 0
      %506 = vmatpush2.bf16.msra.mxu0 %v451
      %507 = vmatprep.mubr.bf16.mxu0 %v346
      %508 = vmatmul.mubr.bf16.gmra.mxu0 %v345
      %v509 = vpop.f32.mrf.mxu0
      %v510 = vadd.f32 0.0, %v509
      %v511 = vpop.f32.mrf.mxu0
      %v512 = vpop.f32.mrf.mxu0
      %v513 = vpop.f32.mrf.mxu0
      %514 = vdwg.mxu0
      %v515 = vld [vmem:[%s1] sm:$0xff]
      %vm516 = vcmask 1048064
      %517 = vrot.lane.b32.xlu0 %v510, 64
      %v518 = vpop.permute.xlu0 %517
      %v519 = vsel %vm516, %v518, %v510
      %520 = vrot.lane.b32.xlu0 %v519, 64
      %v521 = vpop.permute.xlu0 %520
      %v522 = vsel %vm516, %v521, %v510
      %v523 = vlaneseq
      %v524 = vshrl.u32 %v523, 7
      %v525 = vsub.s32 0, %v524
      %v526 = vrot.slane %v308, %v525
      %528 = vrot.lane.b32.xlu0 %v526, 55
      %v529 = vpop.permute.xlu0 %528
      %v531 = vmul.f32 %v522, %v529
      %v532 = vlaneseq
      %v533 = vshrl.u32 %v532, 7
      %v534 = vsub.s32 1, %v533
      %v535 = vrot.slane %v308, %v534
      %537 = vrot.lane.b32.xlu0 %v535, 56
      %v538 = vpop.permute.xlu0 %537
      %v540 = vmul.f32 %v522, %v538
      %v541 = vlaneseq
      %v542 = vshrl.u32 %v541, 7
      %v543 = vsub.s32 2, %v542
      %v544 = vrot.slane %v308, %v543
      %546 = vrot.lane.b32.xlu0 %v544, 57
      %v547 = vpop.permute.xlu0 %546
      %v549 = vmul.f32 %v522, %v547
      %v550 = vlaneseq
      %v551 = vshrl.u32 %v550, 7
      %v552 = vsub.s32 3, %v551
      %v553 = vrot.slane %v308, %v552
      %555 = vrot.lane.b32.xlu0 %v553, 63
      %v556 = vpop.permute.xlu0 %555
      %v558 = vmul.f32 %v522, %v556
      %v559 = vlaneseq
      %v560 = vshrl.u32 %v559, 7
      %v561 = vsub.s32 5, %v560
      %v562 = vrot.slane %v308, %v561
      %564 = vrot.lane.b32.xlu0 %v562, 1
      %v565 = vpop.permute.xlu0 %564
      %v567 = vmul.f32 %v522, %v565
      %v568 = vlaneseq
      %v569 = vshrl.u32 %v568, 7
      %v570 = vsub.s32 6, %v569
      %v571 = vrot.slane %v308, %v570
      %573 = vrot.lane.b32.xlu0 %v571, 7
      %v574 = vpop.permute.xlu0 %573
      %v576 = vmul.f32 %v522, %v574
      %v577 = vlaneseq
      %v578 = vshrl.u32 %v577, 7
      %v579 = vsub.s32 7, %v578
      %v580 = vrot.slane %v308, %v579
      %582 = vrot.lane.b32.xlu0 %v580, 8
      %v583 = vpop.permute.xlu0 %582
      %v585 = vmul.f32 %v522, %v583
      %v586 = vlaneseq
      %v587 = vshrl.u32 %v586, 7
      %v588 = vsub.s32 0, %v587
      %v589 = vrot.slane %v309, %v588
      %591 = vrot.lane.b32.xlu0 %v589, 9
      %v592 = vpop.permute.xlu0 %591
      %v594 = vmul.f32 %v522, %v592
      %v596 = vrot.slane %v540, 4
      %597 = vrot.lane.b32.xlu0 %v596, 127
      %v598 = vpop.permute.xlu0 %597
      %601 = vrot.lane.b32.xlu0 %v549, 126
      %v602 = vpop.permute.xlu0 %601
      %v605 = vrot.slane %v558, 4
      %606 = vrot.lane.b32.xlu0 %v605, 120
      %v607 = vpop.permute.xlu0 %606
      %610 = vrot.lane.b32.xlu0 %v510, 55
      %v611 = vpop.permute.xlu0 %610
      %v614 = vrot.slane %v567, 4
      %615 = vrot.lane.b32.xlu0 %v614, 54
      %v616 = vpop.permute.xlu0 %615
      %619 = vrot.lane.b32.xlu0 %v576, 48
      %v620 = vpop.permute.xlu0 %619
      %v623 = vrot.slane %v585, 4
      %624 = vrot.lane.b32.xlu0 %v623, 47
      %v625 = vpop.permute.xlu0 %624
      %628 = vrot.lane.b32.xlu0 %v594, 46
      %v629 = vpop.permute.xlu0 %628
      %vm630 = vcmask 1043456
      %v631 = vsel %vm630, %v531, %v598
      %v632 = vsel %vm630, %v602, %v607
      %v633 = vsel %vm630, %v611, %v616
      %v634 = vsel %vm630, %v620, %v625
      %639 = vrot.lane.b32.xlu0 %v631, 73
      %v640 = vpop.permute.xlu0 %639
      %641 = vrot.lane.b32.xlu0 %v632, 73
      %v642 = vpop.permute.xlu0 %641
      %643 = vrot.lane.b32.xlu0 %v633, 73
      %v644 = vpop.permute.xlu0 %643
      %645 = vrot.lane.b32.xlu0 %v634, 73
      %v646 = vpop.permute.xlu0 %645
      %647 = vrot.lane.b32.xlu0 %v629, 73
      %v648 = vpop.permute.xlu0 %647
      %vm653 = vcmask 293888
      %v655 = vsel %vm653, %v515, 0
      %v657 = vsel %vm630, %v648, 0
      %659 = vmatprep.subr.mxu0 0.0
      %660 = vmatpush1.msra.mxu0 0.0
      %661 = vmatprep.subr.mxu0 0.0
      %662 = vmatpush1.msra.mxu0 0.0
      %663 = vmatprep.subr.mxu0 0.0
      %664 = vmatpush1.msra.mxu0 0.0
      %665 = vmatprep.subr.mxu0 0.0
      %666 = vmatpush1.msra.mxu0 0.0
      %667 = vmatprep.subr.mxu0 0.0
      %668 = vmatpush1.msra.mxu0 0.0
      %669 = vmatprep.subr.mxu0 0.0
      %670 = vmatpush1.msra.mxu0 0.0
      %671 = vmatprep.subr.mxu0 0.0
      %672 = vmatpush1.msra.mxu0 0.0
      %673 = vmatprep.subr.mxu0 0.0
      %674 = vmatpush1.msra.mxu0 0.0
      %675 = vmatprep.subr.mxu0 0.0
      %676 = vmatpush1.msra.mxu0 0.0
      %677 = vmatprep.subr.mxu0 0.0
      %678 = vmatpush1.msra.mxu0 0.0
      %679 = vmatprep.subr.mxu0 0.0
      %680 = vmatpush1.msra.mxu0 0.0
      %681 = vmatprep.subr.mxu0 0.0
      %682 = vmatpush1.msra.mxu0 %v657
      %683 = vmatprep.subr.mxu0 0.0
      %684 = vmatpush1.msra.mxu0 %v646
      %685 = vmatprep.subr.mxu0 0.0
      %686 = vmatpush1.msra.mxu0 %v644
      %687 = vmatprep.subr.mxu0 0.0
      %688 = vmatpush1.msra.mxu0 %v642
      %689 = vmatprep.subr.mxu0 0.0
      %690 = vmatpush1.msra.mxu0 %v640
      %691 = vmatprep.subr.mxu0 0.0
      %692 = vmatpush2.msra.mxu0 0.0
      %693 = vmatprep.subr.mxu0 0.0
      %694 = vmatpush2.msra.mxu0 0.0
      %695 = vmatprep.subr.mxu0 0.0
      %696 = vmatpush2.msra.mxu0 0.0
      %697 = vmatprep.subr.mxu0 0.0
      %698 = vmatpush2.msra.mxu0 0.0
      %699 = vmatprep.subr.mxu0 0.0
      %700 = vmatpush2.msra.mxu0 0.0
      %701 = vmatprep.subr.mxu0 0.0
      %702 = vmatpush2.msra.mxu0 0.0
      %703 = vmatprep.subr.mxu0 0.0
      %704 = vmatpush2.msra.mxu0 0.0
      %705 = vmatprep.subr.mxu0 0.0
      %706 = vmatpush2.msra.mxu0 0.0
      %707 = vmatprep.subr.mxu0 0.0
      %708 = vmatpush2.msra.mxu0 0.0
      %709 = vmatprep.subr.mxu0 0.0
      %710 = vmatpush2.msra.mxu0 0.0
      %711 = vmatprep.subr.mxu0 0.0
      %712 = vmatpush2.msra.mxu0 0.0
      %713 = vmatprep.subr.mxu0 0.0
      %714 = vmatpush2.msra.mxu0 0.0
      %715 = vmatprep.subr.mxu0 0.0
      %716 = vmatpush2.msra.mxu0 0.0
      %717 = vmatprep.subr.mxu0 0.0
      %718 = vmatpush2.msra.mxu0 0.0
      %719 = vmatprep.subr.mxu0 0.0
      %720 = vmatpush2.msra.mxu0 0.0
      %721 = vmatprep.subr.mxu0 0.0
      %722 = vmatpush2.msra.mxu0 0.0
      %723 = vmatprep.mubr.f32.mxu0 0.0
      %724 = vmatmul.mubr.f32.gmra.mxu0 %v655
      %v725 = vpop.f32.mrf.mxu0
      %v726 = vadd.f32 0.0, %v725
      %v727 = vpop.f32.mrf.mxu0
      %728 = vdwg.mxu0
      %v729 = vmul.f32 %v726, %v726
      %vm730 = vcmask 523264
      %v731 = vsel %vm730, %v726, 0.0
      %732 = vadd.xlane.f32.xlu0 %v731
      %v733 = vpop.xlane.xlu0 %732
      %v734 = vsel %vm730, %v729, 0.0
      %735 = vadd.xlane.f32.xlu0 %v734
      %v736 = vpop.xlane.xlu0 %735
      %v737 = vmul.f32 %v733, 0.015625
      %v738 = vmul.f32 %v736, 0.015625
      %v739 = vmul.f32 %v737, %v737
      %v740 = vsub.f32 %v738, %v739
      %v741 = vmax.f32 %v740, 0.0
      %v742 = vsub.f32 %v726, %v737
      %v743 = vadd.f32 %v741, 1e-05
      %v744 = vrsqrt.pop %v743
      %v745 = vmul.f32 %v742, %v744
      %vm746 = vcmp.gt.f32.partialorder %v745, 0.0
      %v747 = vmul.f32 %v745, 0.01
      %v748 = vsel %vm746, %v745, %v747
      %v749 = vld [vmem:[%s2] sm:$0xff]
      %750 = vrot.lane.b32.xlu0 %v748, 64
      %v751 = vpop.permute.xlu0 %750
      %v752 = vsel %vm516, %v751, %v748
      %753 = vrot.lane.b32.xlu0 %v752, 64
      %v754 = vpop.permute.xlu0 %753
      %v755 = vsel %vm516, %v754, %v748
      %v756 = vmul.f32 %v755, %v529
      %v757 = vmul.f32 %v755, %v538
      %v758 = vmul.f32 %v755, %v547
      %v759 = vmul.f32 %v755, %v556
      %v760 = vmul.f32 %v755, %v565
      %v761 = vmul.f32 %v755, %v574
      %v762 = vmul.f32 %v755, %v583
      %v763 = vmul.f32 %v755, %v592
      %765 = vrot.lane.b32.xlu0 %v757, 127
      %v766 = vpop.permute.xlu0 %765
      %768 = vrot.lane.b32.xlu0 %v758, 126
      %v769 = vpop.permute.xlu0 %768
      %771 = vrot.lane.b32.xlu0 %v759, 120
      %v772 = vpop.permute.xlu0 %771
      %774 = vrot.lane.b32.xlu0 %v748, 55
      %v775 = vpop.permute.xlu0 %774
      %777 = vrot.lane.b32.xlu0 %v760, 54
      %v778 = vpop.permute.xlu0 %777
      %780 = vrot.lane.b32.xlu0 %v761, 48
      %v781 = vpop.permute.xlu0 %780
      %783 = vrot.lane.b32.xlu0 %v762, 47
      %v784 = vpop.permute.xlu0 %783
      %786 = vrot.lane.b32.xlu0 %v763, 46
      %v787 = vpop.permute.xlu0 %786
      %789 = vrot.lane.b32.xlu0 %v756, 73
      %v790 = vpop.permute.xlu0 %789
      %791 = vrot.lane.b32.xlu0 %v766, 73
      %v792 = vpop.permute.xlu0 %791
      %793 = vrot.lane.b32.xlu0 %v769, 73
      %v794 = vpop.permute.xlu0 %793
      %795 = vrot.lane.b32.xlu0 %v772, 73
      %v796 = vpop.permute.xlu0 %795
      %797 = vrot.lane.b32.xlu0 %v775, 73
      %v798 = vpop.permute.xlu0 %797
      %799 = vrot.lane.b32.xlu0 %v778, 73
      %v800 = vpop.permute.xlu0 %799
      %801 = vrot.lane.b32.xlu0 %v781, 73
      %v802 = vpop.permute.xlu0 %801
      %803 = vrot.lane.b32.xlu0 %v784, 73
      %v804 = vpop.permute.xlu0 %803
      %805 = vrot.lane.b32.xlu0 %v787, 73
      %v806 = vpop.permute.xlu0 %805
      %vm816 = vcmask 588800
      %v818 = vsel %vm816, %v749, 0
      %820 = vmatprep.subr.mxu0 0.0
      %821 = vmatpush1.msra.mxu0 0.0
      %822 = vmatprep.subr.mxu0 0.0
      %823 = vmatpush1.msra.mxu0 0.0
      %824 = vmatprep.subr.mxu0 0.0
      %825 = vmatpush1.msra.mxu0 0.0
      %826 = vmatprep.subr.mxu0 0.0
      %827 = vmatpush1.msra.mxu0 0.0
      %828 = vmatprep.subr.mxu0 0.0
      %829 = vmatpush1.msra.mxu0 0.0
      %830 = vmatprep.subr.mxu0 0.0
      %831 = vmatpush1.msra.mxu0 0.0
      %832 = vmatprep.subr.mxu0 0.0
      %833 = vmatpush1.msra.mxu0 0.0
      %834 = vmatprep.subr.mxu0 0.0
      %835 = vmatpush1.msra.mxu0 %v806
      %836 = vmatprep.subr.mxu0 0.0
      %837 = vmatpush1.msra.mxu0 %v804
      %838 = vmatprep.subr.mxu0 0.0
      %839 = vmatpush1.msra.mxu0 %v802
      %840 = vmatprep.subr.mxu0 0.0
      %841 = vmatpush1.msra.mxu0 %v800
      %842 = vmatprep.subr.mxu0 0.0
      %843 = vmatpush1.msra.mxu0 %v798
      %844 = vmatprep.subr.mxu0 0.0
      %845 = vmatpush1.msra.mxu0 %v796
      %846 = vmatprep.subr.mxu0 0.0
      %847 = vmatpush1.msra.mxu0 %v794
      %848 = vmatprep.subr.mxu0 0.0
      %849 = vmatpush1.msra.mxu0 %v792
      %850 = vmatprep.subr.mxu0 0.0
      %851 = vmatpush1.msra.mxu0 %v790
      %852 = vmatprep.subr.mxu0 0.0
      %853 = vmatpush2.msra.mxu0 0.0
      %854 = vmatprep.subr.mxu0 0.0
      %855 = vmatpush2.msra.mxu0 0.0
      %856 = vmatprep.subr.mxu0 0.0
      %857 = vmatpush2.msra.mxu0 0.0
      %858 = vmatprep.subr.mxu0 0.0
      %859 = vmatpush2.msra.mxu0 0.0
      %860 = vmatprep.subr.mxu0 0.0
      %861 = vmatpush2.msra.mxu0 0.0
      %862 = vmatprep.subr.mxu0 0.0
      %863 = vmatpush2.msra.mxu0 0.0
      %864 = vmatprep.subr.mxu0 0.0
      %865 = vmatpush2.msra.mxu0 0.0
      %866 = vmatprep.subr.mxu0 0.0
      %867 = vmatpush2.msra.mxu0 0.0
      %868 = vmatprep.subr.mxu0 0.0
      %869 = vmatpush2.msra.mxu0 0.0
      %870 = vmatprep.subr.mxu0 0.0
      %871 = vmatpush2.msra.mxu0 0.0
      %872 = vmatprep.subr.mxu0 0.0
      %873 = vmatpush2.msra.mxu0 0.0
      %874 = vmatprep.subr.mxu0 0.0
      %875 = vmatpush2.msra.mxu0 0.0
      %876 = vmatprep.subr.mxu0 0.0
      %877 = vmatpush2.msra.mxu0 0.0
      %878 = vmatprep.subr.mxu0 0.0
      %879 = vmatpush2.msra.mxu0 0.0
      %880 = vmatprep.subr.mxu0 0.0
      %881 = vmatpush2.msra.mxu0 0.0
      %882 = vmatprep.subr.mxu0 0.0
      %883 = vmatpush2.msra.mxu0 0.0
      %884 = vmatprep.mubr.f32.mxu0 0.0
      %885 = vmatmul.mubr.f32.gmra.mxu0 %v818
      %v886 = vpop.f32.mrf.mxu0
      %v887 = vadd.f32 0.0, %v886
      %v888 = vpop.f32.mrf.mxu0
      %889 = vdwg.mxu0
      %v890 = vmul.f32 %v887, %v887
      %v891 = vsel %vm730, %v887, 0.0
      %892 = vadd.xlane.f32.xlu0 %v891
      %v893 = vpop.xlane.xlu0 %892
      %v894 = vsel %vm730, %v890, 0.0
      %895 = vadd.xlane.f32.xlu0 %v894
      %v896 = vpop.xlane.xlu0 %895
      %v897 = vmul.f32 %v893, 0.015625
      %v898 = vmul.f32 %v896, 0.015625
      %v899 = vmul.f32 %v897, %v897
      %v900 = vsub.f32 %v898, %v899
      %v901 = vmax.f32 %v900, 0.0
      %v902 = vsub.f32 %v887, %v897
      %v903 = vadd.f32 %v901, 1e-05
      %v904 = vrsqrt.pop %v903
      %v905 = vmul.f32 %v902, %v904
      %vm906 = vcmp.gt.f32.partialorder %v905, 0.0
      %v907 = vmul.f32 %v905, 0.01
      %v908 = vsel %vm906, %v905, %v907
      %v909 = vld [vmem:[%s3] sm:$0xff]
      %v910 = vld [vmem:[%s3 + $0x8] sm:$0xff]
      %vm911 = vcmask 64512
      %v913 = vsel %vm911, %v909, 0
      %v916 = vsel %vm911, %v910, 0
      %918 = vmatprep.subr.mxu0 0.0
      %919 = vmatpush1.msra.mxu0 0.0
      %920 = vmatprep.subr.mxu0 0.0
      %921 = vmatpush1.msra.mxu0 0.0
      %922 = vmatprep.subr.mxu0 0.0
      %923 = vmatpush1.msra.mxu0 0.0
      %924 = vmatprep.subr.mxu0 0.0
      %925 = vmatpush1.msra.mxu0 0.0
      %926 = vmatprep.subr.mxu0 0.0
      %927 = vmatpush1.msra.mxu0 0.0
      %928 = vmatprep.subr.mxu0 0.0
      %929 = vmatpush1.msra.mxu0 0.0
      %930 = vmatprep.subr.mxu0 0.0
      %931 = vmatpush1.msra.mxu0 0.0
      %932 = vmatprep.subr.mxu0 0.0
      %933 = vmatpush1.msra.mxu0 0.0
      %934 = vmatprep.subr.mxu0 0.0
      %935 = vmatpush1.msra.mxu0 0.0
      %936 = vmatprep.subr.mxu0 0.0
      %937 = vmatpush1.msra.mxu0 0.0
      %938 = vmatprep.subr.mxu0 0.0
      %939 = vmatpush1.msra.mxu0 0.0
      %940 = vmatprep.subr.mxu0 0.0
      %941 = vmatpush1.msra.mxu0 0.0
      %942 = vmatprep.subr.mxu0 0.0
      %943 = vmatpush1.msra.mxu0 0.0
      %944 = vmatprep.subr.mxu0 0.0
      %945 = vmatpush1.msra.mxu0 0.0
      %946 = vmatprep.subr.mxu0 0.0
      %947 = vmatpush1.msra.mxu0 0.0
      %948 = vmatprep.subr.mxu0 0.0
      %949 = vmatpush1.msra.mxu0 %v908
      %950 = vmatprep.subr.mxu0 0.0
      %951 = vmatpush2.msra.mxu0 0.0
      %952 = vmatprep.subr.mxu0 0.0
      %953 = vmatpush2.msra.mxu0 0.0
      %954 = vmatprep.subr.mxu0 0.0
      %955 = vmatpush2.msra.mxu0 0.0
      %956 = vmatprep.subr.mxu0 0.0
      %957 = vmatpush2.msra.mxu0 0.0
      %958 = vmatprep.subr.mxu0 0.0
      %959 = vmatpush2.msra.mxu0 0.0
      %960 = vmatprep.subr.mxu0 0.0
      %961 = vmatpush2.msra.mxu0 0.0
      %962 = vmatprep.subr.mxu0 0.0
      %963 = vmatpush2.msra.mxu0 0.0
      %964 = vmatprep.subr.mxu0 0.0
      %965 = vmatpush2.msra.mxu0 0.0
      %966 = vmatprep.subr.mxu0 0.0
      %967 = vmatpush2.msra.mxu0 0.0
      %968 = vmatprep.subr.mxu0 0.0
      %969 = vmatpush2.msra.mxu0 0.0
      %970 = vmatprep.subr.mxu0 0.0
      %971 = vmatpush2.msra.mxu0 0.0
      %972 = vmatprep.subr.mxu0 0.0
      %973 = vmatpush2.msra.mxu0 0.0
      %974 = vmatprep.subr.mxu0 0.0
      %975 = vmatpush2.msra.mxu0 0.0
      %976 = vmatprep.subr.mxu0 0.0
      %977 = vmatpush2.msra.mxu0 0.0
      %978 = vmatprep.subr.mxu0 0.0
      %979 = vmatpush2.msra.mxu0 0.0
      %980 = vmatprep.subr.mxu0 0.0
      %981 = vmatpush2.msra.mxu0 0.0
      %982 = vmatprep.mubr.f32.mxu0 0.0
      %983 = vmatmul.mubr.f32.gmra.mxu0 %v913
      %v984 = vpop.f32.mrf.mxu0
      %v985 = vadd.f32 0.0, %v984
      %v986 = vpop.f32.mrf.mxu0
      %987 = vmatprep.mubr.f32.mxu0 0.0
      %988 = vmatmul.mubr.f32.gmra.mxu0 %v916
      %v989 = vpop.f32.mrf.mxu0
      %v990 = vadd.f32 0.0, %v989
      %v991 = vpop.f32.mrf.mxu0
      %992 = vdwg.mxu0
      %v994 = vrot.slane %v985, 4
      %995 = vrot.lane.b32.xlu0 %v994, 64
      %v996 = vpop.permute.xlu0 %995
      %v999 = vrot.slane %v990, 4
      %1000 = vrot.lane.b32.xlu0 %v999, 64
      %v1001 = vpop.permute.xlu0 %1000
      %v1003 = vsel %vm730, %v985, %v996
      %v1004 = vsel %vm730, %v990, %v1001
      %v1005 = vpack.c.bf16 %v1003, %v1003
      %v1006 = vpack.c.bf16 %v1004, %v1004
      %v1007 = vld [vmem:[%s7] sm:$0xff]
      %v1008 = vld [vmem:[%s7 + $0x8] sm:$0xff]
      %v1009 = vld [vmem:[%s7 + $0x10] sm:$0xff]
      %v1010 = vld [vmem:[%s7 + $0x18] sm:$0xff]
      %v1011 = vld [vmem:[%s7 + $0x20] sm:$0xff]
      %v1012 = vld [vmem:[%s7 + $0x28] sm:$0xff]
      %v1013 = vld [vmem:[%s7 + $0x30] sm:$0xff]
      %v1014 = vld [vmem:[%s7 + $0x38] sm:$0xff]
      %v1015 = vld [vmem:[%s7 + $0x40] sm:$0xff]
      %v1016 = vld [vmem:[%s7 + $0x48] sm:$0xff]
      %v1017 = vld [vmem:[%s7 + $0x50] sm:$0xff]
      %v1018 = vld [vmem:[%s7 + $0x58] sm:$0xff]
      %v1019 = vld [vmem:[%s7 + $0x60] sm:$0xff]
      %v1020 = vld [vmem:[%s7 + $0x68] sm:$0xff]
      %v1021 = vld [vmem:[%s7 + $0x70] sm:$0xff]
      %v1022 = vld [vmem:[%s7 + $0x78] sm:$0xff]
      %v1023 = vld [vmem:[%s7 + $0x80] sm:$0xff]
      %v1024 = vld [vmem:[%s7 + $0x88] sm:$0xff]
      %v1025 = vld [vmem:[%s7 + $0x90] sm:$0xff]
      %v1026 = vld [vmem:[%s7 + $0x98] sm:$0xff]
      %v1027 = vld [vmem:[%s7 + $0xa0] sm:$0xff]
      %v1028 = vld [vmem:[%s7 + $0xa8] sm:$0xff]
      %v1029 = vld [vmem:[%s7 + $0xb0] sm:$0xff]
      %v1030 = vld [vmem:[%s7 + $0xb8] sm:$0xff]
      %v1031 = vld [vmem:[%s7 + $0xc0] sm:$0xff]
      %v1032 = vld [vmem:[%s7 + $0xc8] sm:$0xff]
      %v1033 = vld [vmem:[%s7 + $0xd0] sm:$0xff]
      %v1034 = vld [vmem:[%s7 + $0xd8] sm:$0xff]
      %v1035 = vld [vmem:[%s7 + $0xe0] sm:$0xff]
      %v1036 = vld [vmem:[%s7 + $0xe8] sm:$0xff]
      %v1037 = vld [vmem:[%s7 + $0xf0] sm:$0xff]
      %v1038 = vld [vmem:[%s7 + $0xf8] sm:$0xff]
      %v1039 = vld [vmem:[%s4] sm:$0xf]
      %1041 = vset.pattern.permute.xlu0 0
      %1042 = vperm.xlu0 %1041, %v1039
      %v1043 = vpop.permute.xlu0 %1042
      %v1077 = vunpack.c.l.b16 %v1007
      %v1078 = vunpack.c.h.b16 %v1007
      %v1079 = vunpack.c.l.b16 %v1008
      %v1080 = vunpack.c.h.b16 %v1008
      %v1081 = vunpack.c.l.b16 %v1009
      %v1082 = vunpack.c.h.b16 %v1009
      %v1083 = vunpack.c.l.b16 %v1010
      %v1084 = vunpack.c.h.b16 %v1010
      %v1085 = vunpack.c.l.b16 %v1011
      %v1086 = vunpack.c.h.b16 %v1011
      %v1087 = vunpack.c.l.b16 %v1012
      %v1088 = vunpack.c.h.b16 %v1012
      %v1089 = vunpack.c.l.b16 %v1013
      %v1090 = vunpack.c.h.b16 %v1013
      %v1091 = vunpack.c.l.b16 %v1014
      %v1092 = vunpack.c.h.b16 %v1014
      %v1093 = vunpack.c.l.b16 %v1015
      %v1094 = vunpack.c.h.b16 %v1015
      %v1095 = vunpack.c.l.b16 %v1016
      %v1096 = vunpack.c.h.b16 %v1016
      %v1097 = vunpack.c.l.b16 %v1017
      %v1098 = vunpack.c.h.b16 %v1017
      %v1099 = vunpack.c.l.b16 %v1018
      %v1100 = vunpack.c.h.b16 %v1018
      %v1101 = vunpack.c.l.b16 %v1019
      %v1102 = vunpack.c.h.b16 %v1019
      %v1103 = vunpack.c.l.b16 %v1020
      %v1104 = vunpack.c.h.b16 %v1020
      %v1105 = vunpack.c.l.b16 %v1021
      %v1106 = vunpack.c.h.b16 %v1021
      %v1107 = vunpack.c.l.b16 %v1022
      %v1108 = vunpack.c.h.b16 %v1022
      %v1109 = vunpack.c.l.b16 %v1023
      %v1110 = vunpack.c.h.b16 %v1023
      %v1111 = vunpack.c.l.b16 %v1024
      %v1112 = vunpack.c.h.b16 %v1024
      %v1113 = vunpack.c.l.b16 %v1025
      %v1114 = vunpack.c.h.b16 %v1025
      %v1115 = vunpack.c.l.b16 %v1026
      %v1116 = vunpack.c.h.b16 %v1026
      %v1117 = vunpack.c.l.b16 %v1027
      %v1118 = vunpack.c.h.b16 %v1027
      %v1119 = vunpack.c.l.b16 %v1028
      %v1120 = vunpack.c.h.b16 %v1028
      %v1121 = vunpack.c.l.b16 %v1029
      %v1122 = vunpack.c.h.b16 %v1029
      %v1123 = vunpack.c.l.b16 %v1030
      %v1124 = vunpack.c.h.b16 %v1030
      %v1125 = vunpack.c.l.b16 %v1031
      %v1126 = vunpack.c.h.b16 %v1031
      %v1127 = vunpack.c.l.b16 %v1032
      %v1128 = vunpack.c.h.b16 %v1032
      %v1129 = vunpack.c.l.b16 %v1033
      %v1130 = vunpack.c.h.b16 %v1033
      %v1131 = vunpack.c.l.b16 %v1034
      %v1132 = vunpack.c.h.b16 %v1034
      %v1133 = vunpack.c.l.b16 %v1035
      %v1134 = vunpack.c.h.b16 %v1035
      %v1135 = vunpack.c.l.b16 %v1036
      %v1136 = vunpack.c.h.b16 %v1036
      %v1137 = vunpack.c.l.b16 %v1037
      %v1138 = vunpack.c.h.b16 %v1037
      %v1139 = vunpack.c.l.b16 %v1038
      %v1140 = vunpack.c.h.b16 %v1038
      %v1141 = vpack.c.b16 %v1079, %v1077
      %v1142 = vpack.c.b16 %v1080, %v1078
      %v1143 = vpack.c.b16 %v1083, %v1081
      %v1144 = vpack.c.b16 %v1084, %v1082
      %v1145 = vpack.c.b16 %v1087, %v1085
      %v1146 = vpack.c.b16 %v1088, %v1086
      %v1147 = vpack.c.b16 %v1091, %v1089
      %v1148 = vpack.c.b16 %v1092, %v1090
      %v1149 = vpack.c.b16 %v1095, %v1093
      %v1150 = vpack.c.b16 %v1096, %v1094
      %v1151 = vpack.c.b16 %v1099, %v1097
      %v1152 = vpack.c.b16 %v1100, %v1098
      %v1153 = vpack.c.b16 %v1103, %v1101
      %v1154 = vpack.c.b16 %v1104, %v1102
      %v1155 = vpack.c.b16 %v1107, %v1105
      %v1156 = vpack.c.b16 %v1108, %v1106
      %v1157 = vpack.c.b16 %v1111, %v1109
      %v1158 = vpack.c.b16 %v1112, %v1110
      %v1159 = vpack.c.b16 %v1115, %v1113
      %v1160 = vpack.c.b16 %v1116, %v1114
      %v1161 = vpack.c.b16 %v1119, %v1117
      %v1162 = vpack.c.b16 %v1120, %v1118
      %v1163 = vpack.c.b16 %v1123, %v1121
      %v1164 = vpack.c.b16 %v1124, %v1122
      %v1165 = vpack.c.b16 %v1127, %v1125
      %v1166 = vpack.c.b16 %v1128, %v1126
      %v1167 = vpack.c.b16 %v1131, %v1129
      %v1168 = vpack.c.b16 %v1132, %v1130
      %v1169 = vpack.c.b16 %v1135, %v1133
      %v1170 = vpack.c.b16 %v1136, %v1134
      %v1171 = vpack.c.b16 %v1139, %v1137
      %v1172 = vpack.c.b16 %v1140, %v1138
      %1205 = vmatprep.subr.bf16.mxu0 %v1156
      %1206 = vmatpush1.bf16.msra.mxu0 %v1155
      %1207 = vmatprep.subr.bf16.mxu0 %v1154
      %1208 = vmatpush1.bf16.msra.mxu0 %v1153
      %1209 = vmatprep.subr.bf16.mxu0 %v1152
      %1210 = vmatpush1.bf16.msra.mxu0 %v1151
      %1211 = vmatprep.subr.bf16.mxu0 %v1150
      %1212 = vmatpush1.bf16.msra.mxu0 %v1149
      %1213 = vmatprep.subr.bf16.mxu0 %v1148
      %1214 = vmatpush1.bf16.msra.mxu0 %v1147
      %1215 = vmatprep.subr.bf16.mxu0 %v1146
      %1216 = vmatpush1.bf16.msra.mxu0 %v1145
      %1217 = vmatprep.subr.bf16.mxu0 %v1144
      %1218 = vmatpush1.bf16.msra.mxu0 %v1143
      %1219 = vmatprep.subr.bf16.mxu0 %v1142
      %1220 = vmatpush1.bf16.msra.mxu0 %v1141
      %1221 = vmatprep.subr.bf16.mxu0 %v1172
      %1222 = vmatpush2.bf16.msra.mxu0 %v1171
      %1223 = vmatprep.subr.bf16.mxu0 %v1170
      %1224 = vmatpush2.bf16.msra.mxu0 %v1169
      %1225 = vmatprep.subr.bf16.mxu0 %v1168
      %1226 = vmatpush2.bf16.msra.mxu0 %v1167
      %1227 = vmatprep.subr.bf16.mxu0 %v1166
      %1228 = vmatpush2.bf16.msra.mxu0 %v1165
      %1229 = vmatprep.subr.bf16.mxu0 %v1164
      %1230 = vmatpush2.bf16.msra.mxu0 %v1163
      %1231 = vmatprep.subr.bf16.mxu0 %v1162
      %1232 = vmatpush2.bf16.msra.mxu0 %v1161
      %1233 = vmatprep.subr.bf16.mxu0 %v1160
      %1234 = vmatpush2.bf16.msra.mxu0 %v1159
      %1235 = vmatprep.subr.bf16.mxu0 %v1158
      %1236 = vmatpush2.bf16.msra.mxu0 %v1157
      %1237 = vmatprep.mubr.bf16.mxu0 %v1006
      %1238 = vmatmul.mubr.bf16.gmra.mxu0 %v1005
      %v1239 = vpop.f32.mrf.mxu0
      %v1240 = vadd.f32 %v1043, %v1239
      %v1241 = vpop.f32.mrf.mxu0
      %v1242 = vadd.f32 %v1043, %v1241
      %v1243 = vpop.f32.mrf.mxu0
      %v1244 = vpop.f32.mrf.mxu0
      %1245 = vdwg.mxu0
      %v1248 = vrot.slane %v1240, 4
      %v1249 = vrot.slane %v1242, 4
      %v1252 = vsel %vm630, %v307, %v1248
      %v1253 = vsel %vm630, %v311, %v1249
      %1254 = vst [vmem:[%s305] sm:$0xff] %v1252
      %1255 = vst [vmem:[%s305 + $0x8] sm:$0xff] %v1253
      %p1256 = scmp.lt.s32.totalorder %s19, 1
      %s1257 = scalar_select %p1256, %s19, 1
      %s1258 = smul.addr %s1257, 2
      %s1259 = smul.addr %s1258, 8
      %s1260 = scalar_lea.vmem %s8, %s1259
      // Predicated region
      $region53: #{unet_innermost_forward.1} parent=51 // pred_check
        %p1261 = pneg %p210
      $region54: #{unet_innermost_forward.1} parent=51 // pred_check_branch
        %1263 = sbr.rel (%p1261) target = $region56
      $region55: #{unet_innermost_forward.1} parent=51 // pred_region
        _
      $region56: #{unet_innermost_forward.1} parent=51 // pred_fallthru
        _
    $region52: #{unet_innermost_forward.1} parent=5 // pred_fallthru
      _
    %p1264 = scmp.le.s32.totalorder 2, %s14
    // Predicated region
    $region57: #{unet_innermost_forward.1} parent=5 // pred_check
      %p1265 = pneg %p1264
    $region58: #{unet_innermost_forward.1} parent=5 // pred_check_branch
      %1267 = sbr.rel (%p1265) target = $region60
    $region59: #{unet_innermost_forward.1} parent=5 // pred_region
      %s1268 = ssub.s32 %s14, 2
      // Predicated region
      $region61: #{unet_innermost_forward.1} parent=59 // pred_check
        %p1269 = pneg %p216
      $region62: #{unet_innermost_forward.1} parent=59 // pred_check_branch
        %1271 = sbr.rel (%p1269) target = $region64
      $region63: #{unet_innermost_forward.1} parent=59 // pred_region
        %p1272 = scmp.lt.s32.totalorder %s20, 1
        %s1273 = scalar_select %p1272, %s20, 1
        %s1274 = smul.addr %s1273, 2
        %s1275 = smul.addr %s1274, 8
        %s1276 = scalar_lea.vmem %s8, %s1275
      $region64: #{unet_innermost_forward.1} parent=59 // pred_fallthru
        _
    $region60: #{unet_innermost_forward.1} parent=5 // pred_fallthru
      _
  $region6: #{unet_innermost_forward.1} parent=0 // loop_footer
    %s18 = sadd.s32 1, %s14
  $region7: #{unet_innermost_forward.1} parent=0 // loop_footer_branch
    %13 = sbr.rel target = $region3
  $region8: #{unet_innermost_forward.1} parent=0 // loop_exit
    _

</llo_original>
